<compile_context>
chip_gen: v7x
topology: tpu7x:2x2x1
jax: 0.10.0
libtpu: 0.0.40
codegen_flags: <defaults>
</compile_context>

<pallas_src>
import functools
import math

import jax
import jax.numpy as jnp
from jax.experimental import pallas as pl
from jax.experimental.pallas import tpu as pltpu

_LN_EPS = 1e-5


# ----------------------------- compiler params --------------------------------

def _default_vmem_limit():
    # Raise the scoped-VMEM limit (v5e default 16 MiB) toward physical capacity,
    # leaving headroom for the runtime. Safe fallback: leave the default.
    try:
        cap = int(pltpu.get_tpu_info().vmem_capacity_bytes)
        return max(32 * 1024 * 1024, (cap * 3) // 4)
    except Exception:
        return None


_VMEM_LIMIT = _default_vmem_limit()


def _compiler_params(dimension_semantics):
    kwargs = dict(dimension_semantics=dimension_semantics)
    if _VMEM_LIMIT is not None:
        kwargs["vmem_limit_bytes"] = _VMEM_LIMIT
    return pltpu.CompilerParams(**kwargs)


# ----------------------------- in-kernel helpers -------------------------------

def _erf_approx(z):
    # Abramowitz & Stegun 7.1.26 (|err| <= 1.5e-7); exp/mul/add/select only.
    a1, a2, a3, a4, a5 = (0.254829592, -0.284496736, 1.421413741,
                          -1.453152027, 1.061405429)
    p = 0.3275911
    s = jnp.where(z < 0.0, -1.0, 1.0)
    za = jnp.abs(z)
    t = 1.0 / (1.0 + p * za)
    poly = ((((a5 * t + a4) * t + a3) * t + a2) * t + a1) * t
    return s * (1.0 - poly * jnp.exp(-za * za))


def _gelu(x):
    # Exact (erf-based) BERT gelu, evaluated in f32.
    return x * 0.5 * (1.0 + _erf_approx(x * (1.0 / math.sqrt(2.0))))


def _ln(y, g, b, eps):
    # LayerNorm in f32.
    mu = jnp.mean(y, axis=-1, keepdims=True)
    var = jnp.mean(jnp.square(y - mu), axis=-1, keepdims=True)
    return (y - mu) * jax.lax.rsqrt(var + eps) * g + b


# ----------------------------- kernels -----------------------------------------

def attn_block_kernel(x_ref, im_ref, cm_ref, wqkv_ref, bqkv_ref, wo_ref, bo_ref,
                      g_ref, b_ref, o_ref, qkv_s, acc_s, *, num_heads, ln_eps):
    # x_ref: (S, H) bf16; im_ref/cm_ref: (1, S) f32 row masks;
    # wqkv_ref: (H, 3H) bf16 (scale folded into Q columns); wo_ref: (nH, d, H) bf16.
    x = x_ref[...]
    S, H = x.shape
    d = H // num_heads

    # Fused QKV projection (one MXU call), f32 accumulation into VMEM scratch.
    qkv_s[...] = (jnp.dot(x, wqkv_ref[...], preferred_element_type=jnp.float32)
                  + bqkv_ref[...])

    # Build the additive UniLM mask in-kernel: tril(input_mask) + context_mask.
    q_idx = jax.lax.broadcasted_iota(jnp.int32, (S, S), 0)   # query row
    k_idx = jax.lax.broadcasted_iota(jnp.int32, (S, S), 1)   # key column
    im = im_ref[...]                                          # (1, S) f32
    cm = cm_ref[...]
    allowed = jnp.clip(jnp.where(k_idx <= q_idx, im, 0.0) + cm, 0.0, 1.0)
    add_mask = (1.0 - allowed) * -10000.0                     # (S, S) f32

    # Initialize the lane-dense (S, H) accumulator with residual + output bias.
    acc_s[...] = x.astype(jnp.float32) + bo_ref[...]

    # TODO(synk): for 12+ heads / long S move heads to a grid axis (or
    #             fori_loop + head-major scratch) and add K-tiled online softmax.
    for h in range(num_heads):                                # static unroll
        lo = h * d
        qh = qkv_s[:, lo:lo + d].astype(x.dtype)              # scale pre-folded
        kh = qkv_s[:, H + lo:H + lo + d].astype(x.dtype)
        vh = qkv_s[:, 2 * H + lo:2 * H + lo + d].astype(x.dtype)
        # q @ k^T without an explicit transpose: contract last dims of both.
        scores = jax.lax.dot_general(qh, kh, (((1,), (1,)), ((), ())),
                                     preferred_element_type=jnp.float32)
        scores = scores + add_mask
        m = jnp.max(scores, axis=-1, keepdims=True)
        p = jnp.exp(scores - m)
        l = jnp.sum(p, axis=-1, keepdims=True)
        # attention-prob dropout is identity in eval mode
        ctx = jnp.dot(p.astype(x.dtype), vh, preferred_element_type=jnp.float32)
        ctx = ctx * pl.reciprocal(l, approx=True)             # post-PV normalize
        # Fold the output projection into the head loop (lane-dense (S,H) acc).
        acc_s[...] += jnp.dot(ctx.astype(x.dtype), wo_ref[h],
                              preferred_element_type=jnp.float32)

    # BertSelfOutput: residual already in acc; post-LayerNorm in f32.
    o_ref[...] = _ln(acc_s[...], g_ref[...], b_ref[...], ln_eps).astype(o_ref.dtype)


def ffn_block_kernel(x_ref, w1_ref, b1_ref, w2_ref, b2_ref, g_ref, b_ref, o_ref,
                     *, ln_eps):
    # x_ref: (tR, H) bf16; w1: (H, I) bf16; w2: (I, H) bf16.
    x = x_ref[...]
    h = jnp.dot(x, w1_ref[...], preferred_element_type=jnp.float32) + b1_ref[...]
    h = _gelu(h)                                              # f32
    y = (jnp.dot(h.astype(x.dtype), w2_ref[...],
                 preferred_element_type=jnp.float32)
         + b2_ref[...] + x.astype(jnp.float32))
    o_ref[...] = _ln(y, g_ref[...], b_ref[...], ln_eps).astype(o_ref.dtype)


def mlm_head_kernel(x_ref, wt_ref, bt_ref, g_ref, b_ref, emb_ref, add_ref, o_ref,
                    h_s, *, ln_eps):
    # x_ref: (R, H) bf16; emb_ref: (Vt, H) bf16 tied-decoder vocab tile;
    # add_ref: (R, Vt) f32 additive (decoder bias + vocab mask).
    @pl.when(pl.program_id(0) == 0)
    def _():
        # BertPredictionHeadTransform computed once, reused for all vocab tiles.
        h = (jnp.dot(x_ref[...], wt_ref[...], preferred_element_type=jnp.float32)
             + bt_ref[...])
        h = _gelu(h)
        h = _ln(h, g_ref[...], b_ref[...], ln_eps)
        h_s[...] = h.astype(h_s.dtype)

    # h @ emb_tile.T without transposing emb: contract the last dims of both.
    logits = jax.lax.dot_general(h_s[...], emb_ref[...], (((1,), (1,)), ((), ())),
                                 preferred_element_type=jnp.float32)
    o_ref[...] = (logits + add_ref[...]).astype(o_ref.dtype)


# ----------------------------- pallas wrappers ---------------------------------

def _row_tile(n, candidates=(512, 256, 128)):
    for c in candidates:
        if n % c == 0:
            return c
    return n


def _vocab_tile(v, candidates=(4096, 2048, 1024, 512)):
    for c in candidates:
        if v % c == 0:
            return c
    return v


def _attention_block(x, im_rows, cm_rows, lp, num_heads):
    B, S, H = x.shape
    H3 = lp["wqkv"].shape[1]
    d = H // num_heads
    x_spec = pl.BlockSpec((None, S, H), lambda b: (b, 0, 0))
    m_spec = pl.BlockSpec((None, 1, S), lambda b: (b, 0, 0))
    return pl.pallas_call(
        functools.partial(attn_block_kernel, num_heads=num_heads, ln_eps=_LN_EPS),
        out_shape=jax.ShapeDtypeStruct((B, S, H), x.dtype),
        grid=(B,),
        in_specs=[x_spec, m_spec, m_spec,
                  pl.BlockSpec((H, H3), lambda b: (0, 0)),
                  pl.BlockSpec((1, H3), lambda b: (0, 0)),
                  pl.BlockSpec((num_heads, d, H), lambda b: (0, 0, 0)),
                  pl.BlockSpec((1, H), lambda b: (0, 0)),
                  pl.BlockSpec((1, H), lambda b: (0, 0)),
                  pl.BlockSpec((1, H), lambda b: (0, 0))],
        out_specs=x_spec,
        scratch_shapes=[pltpu.VMEM((S, H3), jnp.float32),
                        pltpu.VMEM((S, H), jnp.float32)],
        compiler_params=_compiler_params(("parallel",)),
    )(x, im_rows, cm_rows, lp["wqkv"], lp["bqkv"], lp["wo_h"], lp["bo"],
      lp["ln1_g"], lp["ln1_b"])


def _ffn_block(x, lp):
    B, S, H = x.shape
    I = lp["w1"].shape[1]
    R = B * S
    x2 = x.reshape(R, H)                      # flatten rows: lane-dense, bigger M
    tr = _row_tile(R)
    out = pl.pallas_call(
        functools.partial(ffn_block_kernel, ln_eps=_LN_EPS),
        out_shape=jax.ShapeDtypeStruct((R, H), x.dtype),
        grid=(R // tr,),
        in_specs=[pl.BlockSpec((tr, H), lambda r: (r, 0)),
                  pl.BlockSpec((H, I), lambda r: (0, 0)),
                  pl.BlockSpec((1, I), lambda r: (0, 0)),
                  pl.BlockSpec((I, H), lambda r: (0, 0)),
                  pl.BlockSpec((1, H), lambda r: (0, 0)),
                  pl.BlockSpec((1, H), lambda r: (0, 0)),
                  pl.BlockSpec((1, H), lambda r: (0, 0))],
        out_specs=pl.BlockSpec((tr, H), lambda r: (r, 0)),
        compiler_params=_compiler_params(("parallel",)),
    )(x2, lp["w1"], lp["b1"], lp["w2"], lp["b2"], lp["ln2_g"], lp["ln2_b"])
    return out.reshape(B, S, H)


def _mlm_head(seq2, mlm, add2):
    # seq2: (R, H) bf16 flattened gathered positions; add2: (R, V) f32 additive.
    R, H = seq2.shape
    dec_w = mlm["dec_w"]                      # (V, H) bf16 tied embedding
    V = dec_w.shape[0]
    tv = _vocab_tile(V)
    return pl.pallas_call(
        functools.partial(mlm_head_kernel, ln_eps=_LN_EPS),
        out_shape=jax.ShapeDtypeStruct((R, V), jnp.float32),
        grid=(V // tv,),
        in_specs=[pl.BlockSpec((R, H), lambda j: (0, 0)),
                  pl.BlockSpec((H, H), lambda j: (0, 0)),
                  pl.BlockSpec((1, H), lambda j: (0, 0)),
                  pl.BlockSpec((1, H), lambda j: (0, 0)),
                  pl.BlockSpec((1, H), lambda j: (0, 0)),
                  pl.BlockSpec((tv, H), lambda j: (j, 0)),
                  pl.BlockSpec((R, tv), lambda j: (0, j))],
        out_specs=pl.BlockSpec((R, tv), lambda j: (0, j)),
        scratch_shapes=[pltpu.VMEM((R, H), seq2.dtype)],
        # "arbitrary": the transform scratch is filled at vocab-tile 0 and reused.
        compiler_params=_compiler_params(("arbitrary",)),
    )(seq2, mlm["wt"], mlm["bt"], mlm["ln_g"], mlm["ln_b"], dec_w, add2)


# ----------------------------- parameter prep ----------------------------------

def prepare_params(params, num_heads, compute_dtype=jnp.bfloat16):
    """One-time transform: bf16 MXU operands, fused+pre-scaled QKV, head-major Wo."""
    word = params["emb"]["word"]
    V, H = word.shape
    d = H // num_heads
    scale = 1.0 / math.sqrt(d)
    f32 = lambda a: a.astype(jnp.float32)
    cd = lambda a: a.astype(compute_dtype)

    layers = []
    for lp in params["layers"]:
        wqkv = jnp.concatenate([lp["wq"] * scale, lp["wk"], lp["wv"]], axis=1)
        bqkv = jnp.concatenate([lp["bq"] * scale, lp["bk"], lp["bv"]], axis=1)
        layers.append(dict(
            wqkv=cd(wqkv), bqkv=f32(bqkv),
            wo_h=cd(lp["wo"].reshape(num_heads, d, H)), bo=f32(lp["bo"]),
            ln1_g=f32(lp["ln1_g"]), ln1_b=f32(lp["ln1_b"]),
            w1=cd(lp["w1"]), b1=f32(lp["b1"]),
            w2=cd(lp["w2"]), b2=f32(lp["b2"]),
            ln2_g=f32(lp["ln2_g"]), ln2_b=f32(lp["ln2_b"]),
        ))

    emb, mlm = params["emb"], params["mlm"]
    return dict(
        emb=dict(word=f32(emb["word"]), pos=f32(emb["pos"]), type=f32(emb["type"]),
                 ln_g=f32(emb["ln_g"]), ln_b=f32(emb["ln_b"])),
        layers=layers,
        mlm=dict(wt=cd(mlm["wt"]), bt=f32(mlm["bt"]),
                 ln_g=f32(mlm["ln_g"]), ln_b=f32(mlm["ln_b"]),
                 dec_b=f32(mlm["dec_b"]), dec_w=cd(emb["word"])),
    )


# ----------------------------- full forward ------------------------------------

def _layer_norm_host(x, g, b, eps=_LN_EPS):
    mu = jnp.mean(x, axis=-1, keepdims=True)
    var = jnp.mean(jnp.square(x - mu), axis=-1, keepdims=True)
    return (x - mu) * jax.lax.rsqrt(var + eps) * g + b


def bert_unilm_forward(input_ids, token_type_ids, attention_mask, context_mask,
                       output_idx, vocab_mask, params, num_heads):
    """BertForUniLMInference.forward (eval mode). `params` from prepare_params."""
    B, S = input_ids.shape
    word = params["emb"]["word"]
    V, H = word.shape
    cdt = params["layers"][0]["wqkv"].dtype           # compute dtype (bf16)

    # --- embeddings ---
    # TODO(synk): embedding-table gathers have no clean BlockSpec form at this
    #             scale; lookups + LayerNorm stay in XLA (f32), then cast to bf16.
    pos_ids = jnp.arange(S, dtype=jnp.int32)
    e = (word[input_ids]
         + params["emb"]["pos"][pos_ids][None]
         + params["emb"]["type"][token_type_ids])
    x = _layer_norm_host(e, params["emb"]["ln_g"], params["emb"]["ln_b"]).astype(cdt)

    # --- UniLM mask is rebuilt inside the attention kernel from these rows ---
    im_rows = attention_mask.astype(jnp.float32).reshape(B, 1, S)
    cm_rows = context_mask.astype(jnp.float32).reshape(B, 1, S)

    # --- encoder layers (postln) ---
    for lp in params["layers"]:
        attn_out = _attention_block(x, im_rows, cm_rows, lp, num_heads)
        x = _ffn_block(attn_out, lp)

    # (pooler is computed but discarded by BertForUniLMInference -> skipped)

    # --- gather output positions (glue) and flatten (B,T) -> rows ---
    T = output_idx.shape[1]
    idx = jnp.broadcast_to(output_idx[:, :, None], (B, T, H))
    seq = jnp.take_along_axis(x, idx, axis=1)
    seq2 = seq.reshape(B * T, H)

    # --- decoder bias + vocab mask folded into one additive (rows, V) term ---
    add = jnp.broadcast_to(params["mlm"]["dec_b"], (B, T, V))
    if vocab_mask is not None:
        add = add + ((1.0 - vocab_mask.astype(jnp.float32)) * -10000.0)[:, None, :]
    add2 = add.reshape(B * T, V)

    # --- MLM head (transform + tied decoder, vocab-tiled) ---
    logits = _mlm_head(seq2, params["mlm"], add2).reshape(B, T, V)

    if logits.shape[1] == 1:
        logits = jnp.squeeze(logits, axis=1)
    return logits


# ----------------------------- pure-JAX reference ------------------------------

def _gelu_exact(x):
    return x * 0.5 * (1.0 + jax.lax.erf(x / math.sqrt(2.0)))


def bert_unilm_ref(input_ids, token_type_ids, attention_mask, context_mask,
                   output_idx, vocab_mask, params, num_heads):
    B, S = input_ids.shape
    word = params["emb"]["word"]
    V, H = word.shape
    d = H // num_heads

    pos_ids = jnp.arange(S, dtype=jnp.int32)
    e = (word[input_ids]
         + params["emb"]["pos"][pos_ids][None]
         + params["emb"]["type"][token_type_ids])
    x = _layer_norm_host(e, params["emb"]["ln_g"], params["emb"]["ln_b"])

    im = jnp.broadcast_to(attention_mask[:, None, :].astype(jnp.float32), (B, S, S))
    cm = jnp.broadcast_to(context_mask[:, None, :].astype(jnp.float32), (B, S, S))
    ext = (1.0 - jnp.clip(jnp.tril(im) + cm, 0.0, 1.0)) * -10000.0

    def split(t):
        return t.reshape(B, S, num_heads, d).transpose(0, 2, 1, 3)

    for lp in params["layers"]:
        q = split(x @ lp["wq"] + lp["bq"])
        k = split(x @ lp["wk"] + lp["bk"])
        v = split(x @ lp["wv"] + lp["bv"])
        s = jnp.einsum("bhqd,bhkd->bhqk", q, k) / math.sqrt(d)
        s = s + ext[:, None, :, :]
        p = jax.nn.softmax(s, axis=-1)
        ctx = jnp.einsum("bhqk,bhkd->bhqd", p, v).transpose(0, 2, 1, 3).reshape(B, S, H)
        attn = _layer_norm_host(ctx @ lp["wo"] + lp["bo"] + x, lp["ln1_g"], lp["ln1_b"])
        inter = _gelu_exact(attn @ lp["w1"] + lp["b1"])
        x = _layer_norm_host(inter @ lp["w2"] + lp["b2"] + attn,
                             lp["ln2_g"], lp["ln2_b"])

    T = output_idx.shape[1]
    idx = jnp.broadcast_to(output_idx[:, :, None], (B, T, H))
    seq = jnp.take_along_axis(x, idx, axis=1)

    h = _gelu_exact(seq @ params["mlm"]["wt"] + params["mlm"]["bt"])
    h = _layer_norm_host(h, params["mlm"]["ln_g"], params["mlm"]["ln_b"])
    logits = h @ word.T + params["mlm"]["dec_b"]
    if vocab_mask is not None:
        logits = logits + ((1.0 - vocab_mask.astype(jnp.float32)) * -10000.0)[:, None, :]
    if logits.shape[1] == 1:
        logits = jnp.squeeze(logits, axis=1)
    return logits


# ----------------------------- main ---------------------------------------------

if __name__ == "__main__":
    B, S, H, nH, L = 2, 8, 32, 4, 2       # batch, seq, hidden, heads, layers
    I, V, P, T = 64, 64, 16, 2            # intermediate, vocab, max-pos, out-positions

    key = jax.random.PRNGKey(0)
    keys = iter(jax.random.split(key, 64))
    nrm = lambda shape, scale=0.02: (
        jax.random.normal(next(keys), shape, dtype=jnp.float32) * scale)

    input_ids = jax.random.randint(next(keys), (B, S), 0, V).astype(jnp.int32)
    token_type_ids = jnp.concatenate(
        [jnp.zeros((B, 4), jnp.int32), jnp.ones((B, S - 4), jnp.int32)], axis=1)
    attention_mask = jnp.ones((B, S), jnp.float32)          # all tokens valid
    context_mask = jnp.concatenate(                          # first 4 = prefix/context
        [jnp.ones((B, 4), jnp.float32), jnp.zeros((B, S - 4), jnp.float32)], axis=1)
    output_idx = jnp.array([[5, 7], [4, 6]], dtype=jnp.int32)
    vocab_mask = (jax.random.uniform(next(keys), (B, V)) > 0.1).astype(jnp.float32)

    def ln_params():
        return 1.0 + nrm((1, H)), nrm((1, H))

    layers = []
    for _ in range(L):
        g1, b1 = ln_params()
        g2, b2 = ln_params()
        layers.append(dict(
            wq=nrm((H, H)), bq=nrm((1, H)),
            wk=nrm((H, H)), bk=nrm((1, H)),
            wv=nrm((H, H)), bv=nrm((1, H)),
            wo=nrm((H, H)), bo=nrm((1, H)),
            ln1_g=g1, ln1_b=b1,
            w1=nrm((H, I)), b1=nrm((1, I)),
            w2=nrm((I, H)), b2=nrm((1, H)),
            ln2_g=g2, ln2_b=b2,
        ))
    eg, eb = ln_params()
    mg, mb = ln_params()
    params = dict(
        emb=dict(word=nrm((V, H)), pos=nrm((P, H)), type=nrm((2, H)),
                 ln_g=eg, ln_b=eb),
        layers=layers,
        mlm=dict(wt=nrm((H, H)), bt=nrm((1, H)), ln_g=mg, ln_b=mb,
                 dec_b=nrm((1, V))),
    )

    prepared = prepare_params(params, nH, compute_dtype=jnp.bfloat16)

    fwd = jax.jit(functools.partial(bert_unilm_forward, num_heads=nH))
    out = fwd(input_ids, token_type_ids, attention_mask, context_mask,
              output_idx, vocab_mask, prepared)
    out = jax.block_until_ready(out)

    ref = bert_unilm_ref(input_ids, token_type_ids, attention_mask, context_mask,
                         output_idx, vocab_mask, params, nH)

    assert out.shape == (B, T, V), out.shape
    max_err = float(jnp.max(jnp.abs(out - ref)))
    # bf16 MXU operands (f32 accumulation/stats) -> tolerance loosened vs pure f32.
    assert jnp.allclose(out, ref, atol=3e-2, rtol=3e-2), (
        "mismatch vs reference, max abs err = %e" % max_err)

    print("KERNEL_OK")
</pallas_src>

<mosaic_0001>
module attributes {stable_mosaic.version = 11 : i64} {
  func.func @ffn_block_kernel(%arg0: i32, %arg1: memref<16x32xbf16, #tpu.memory_space<vmem>>, %arg2: memref<32x64xbf16, #tpu.memory_space<vmem>>, %arg3: memref<1x64xf32, #tpu.memory_space<vmem>>, %arg4: memref<64x32xbf16, #tpu.memory_space<vmem>>, %arg5: memref<1x32xf32, #tpu.memory_space<vmem>>, %arg6: memref<1x32xf32, #tpu.memory_space<vmem>>, %arg7: memref<1x32xf32, #tpu.memory_space<vmem>>, %arg8: memref<16x32xbf16, #tpu.memory_space<vmem>>) attributes {dimension_semantics = [#tpu.dimension_semantics<parallel>], iteration_bounds = array<i64: 1>, scalar_prefetch = 0 : i64, scratch_operands = 0 : i64, tpu.core_type = #tpu.core_type<tc>, window_params = [{transform_indices = @transform_0, window_bounds = array<i64: 16, 32>}, {pipeline_mode = #tpu.pipeline_mode<synchronous>, transform_indices = @transform_1, window_bounds = array<i64: 32, 64>}, {pipeline_mode = #tpu.pipeline_mode<synchronous>, transform_indices = @transform_2, window_bounds = array<i64: 1, 64>}, {pipeline_mode = #tpu.pipeline_mode<synchronous>, transform_indices = @transform_3, window_bounds = array<i64: 64, 32>}, {pipeline_mode = #tpu.pipeline_mode<synchronous>, transform_indices = @transform_4, window_bounds = array<i64: 1, 32>}, {pipeline_mode = #tpu.pipeline_mode<synchronous>, transform_indices = @transform_5, window_bounds = array<i64: 1, 32>}, {pipeline_mode = #tpu.pipeline_mode<synchronous>, transform_indices = @transform_6, window_bounds = array<i64: 1, 32>}, {transform_indices = @transform_7, window_bounds = array<i64: 16, 32>}]} {
    %c0 = arith.constant 0 : index
    %c0_0 = arith.constant 0 : index
    %0 = vector.load %arg1[%c0, %c0_0] : memref<16x32xbf16, #tpu.memory_space<vmem>>, vector<16x32xbf16>
    %c0_1 = arith.constant 0 : index
    %c0_2 = arith.constant 0 : index
    %1 = vector.load %arg2[%c0_1, %c0_2] : memref<32x64xbf16, #tpu.memory_space<vmem>>, vector<32x64xbf16>
    %cst = arith.constant dense<0.000000e+00> : vector<16x64xf32>
    %2 = tpu.matmul %0, %1, %cst {dimension_numbers = #tpu.dot_dimension_numbers<[1], [0], [0], [1], [0, 0, 1, 1], [], []>} : vector<16x32xbf16>, vector<32x64xbf16>, vector<16x64xf32> -> vector<16x64xf32>
    %c0_3 = arith.constant 0 : index
    %c0_4 = arith.constant 0 : index
    %3 = vector.load %arg3[%c0_3, %c0_4] : memref<1x64xf32, #tpu.memory_space<vmem>>, vector<1x64xf32>
    %4 = vector.broadcast %3 : vector<1x64xf32> to vector<16x64xf32>
    %5 = arith.addf %2, %4 : vector<16x64xf32>
    %cst_5 = arith.constant 5.000000e-01 : f32
    %6 = vector.broadcast %cst_5 : f32 to vector<16x64xf32>
    %7 = arith.mulf %5, %6 : vector<16x64xf32>
    %cst_6 = arith.constant 0.707106769 : f32
    %8 = vector.broadcast %cst_6 : f32 to vector<16x64xf32>
    %9 = arith.mulf %5, %8 : vector<16x64xf32>
    %cst_7 = arith.constant 0.000000e+00 : f32
    %10 = vector.broadcast %cst_7 : f32 to vector<16x64xf32>
    %11 = arith.cmpf olt, %9, %10 : vector<16x64xf32>
    %cst_8 = arith.constant -1.000000e+00 : f32
    %cst_9 = arith.constant 1.000000e+00 : f32
    %12 = vector.broadcast %cst_8 : f32 to vector<16x64xf32>
    %13 = vector.broadcast %cst_9 : f32 to vector<16x64xf32>
    %14 = arith.select %11, %12, %13 : vector<16x64xi1>, vector<16x64xf32>
    %15 = math.absf %9 : vector<16x64xf32>
    %cst_10 = arith.constant 0.327591091 : f32
    %16 = vector.broadcast %cst_10 : f32 to vector<16x64xf32>
    %17 = arith.mulf %16, %15 : vector<16x64xf32>
    %cst_11 = arith.constant 1.000000e+00 : f32
    %18 = vector.broadcast %cst_11 : f32 to vector<16x64xf32>
    %19 = arith.addf %18, %17 : vector<16x64xf32>
    %cst_12 = arith.constant 1.000000e+00 : f32
    %20 = vector.broadcast %cst_12 : f32 to vector<16x64xf32>
    %21 = arith.divf %20, %19 : vector<16x64xf32>
    %cst_13 = arith.constant 1.06140542 : f32
    %22 = vector.broadcast %cst_13 : f32 to vector<16x64xf32>
    %23 = arith.mulf %22, %21 : vector<16x64xf32>
    %cst_14 = arith.constant -1.45315206 : f32
    %24 = vector.broadcast %cst_14 : f32 to vector<16x64xf32>
    %25 = arith.addf %23, %24 : vector<16x64xf32>
    %26 = arith.mulf %25, %21 : vector<16x64xf32>
    %cst_15 = arith.constant 1.42141378 : f32
    %27 = vector.broadcast %cst_15 : f32 to vector<16x64xf32>
    %28 = arith.addf %26, %27 : vector<16x64xf32>
    %29 = arith.mulf %28, %21 : vector<16x64xf32>
    %cst_16 = arith.constant -0.284496725 : f32
    %30 = vector.broadcast %cst_16 : f32 to vector<16x64xf32>
    %31 = arith.addf %29, %30 : vector<16x64xf32>
    %32 = arith.mulf %31, %21 : vector<16x64xf32>
    %cst_17 = arith.constant 0.254829586 : f32
    %33 = vector.broadcast %cst_17 : f32 to vector<16x64xf32>
    %34 = arith.addf %32, %33 : vector<16x64xf32>
    %35 = arith.mulf %34, %21 : vector<16x64xf32>
    %cst_18 = arith.constant 0.000000e+00 : f32
    %36 = vector.broadcast %cst_18 : f32 to vector<16x64xf32>
    %37 = arith.subf %36, %15 : vector<16x64xf32>
    %38 = arith.mulf %37, %15 : vector<16x64xf32>
    %39 = math.exp %38 : vector<16x64xf32>
    %40 = arith.mulf %35, %39 : vector<16x64xf32>
    %cst_19 = arith.constant 1.000000e+00 : f32
    %41 = vector.broadcast %cst_19 : f32 to vector<16x64xf32>
    %42 = arith.subf %41, %40 : vector<16x64xf32>
    %43 = arith.mulf %14, %42 : vector<16x64xf32>
    %cst_20 = arith.constant 1.000000e+00 : f32
    %44 = vector.broadcast %cst_20 : f32 to vector<16x64xf32>
    %45 = arith.addf %44, %43 : vector<16x64xf32>
    %46 = arith.mulf %7, %45 : vector<16x64xf32>
    %47 = arith.truncf %46 : vector<16x64xf32> to vector<16x64xbf16>
    %c0_21 = arith.constant 0 : index
    %c0_22 = arith.constant 0 : index
    %48 = vector.load %arg4[%c0_21, %c0_22] : memref<64x32xbf16, #tpu.memory_space<vmem>>, vector<64x32xbf16>
    %cst_23 = arith.constant dense<0.000000e+00> : vector<16x32xf32>
    %49 = tpu.matmul %47, %48, %cst_23 {dimension_numbers = #tpu.dot_dimension_numbers<[1], [0], [0], [1], [0, 0, 1, 1], [], []>} : vector<16x64xbf16>, vector<64x32xbf16>, vector<16x32xf32> -> vector<16x32xf32>
    %c0_24 = arith.constant 0 : index
    %c0_25 = arith.constant 0 : index
    %50 = vector.load %arg5[%c0_24, %c0_25] : memref<1x32xf32, #tpu.memory_space<vmem>>, vector<1x32xf32>
    %51 = vector.broadcast %50 : vector<1x32xf32> to vector<16x32xf32>
    %52 = arith.addf %49, %51 : vector<16x32xf32>
    %53 = arith.extf %0 : vector<16x32xbf16> to vector<16x32xf32>
    %54 = arith.addf %52, %53 : vector<16x32xf32>
    %c0_26 = arith.constant 0 : index
    %c0_27 = arith.constant 0 : index
    %55 = vector.load %arg6[%c0_26, %c0_27] : memref<1x32xf32, #tpu.memory_space<vmem>>, vector<1x32xf32>
    %c0_28 = arith.constant 0 : index
    %c0_29 = arith.constant 0 : index
    %56 = vector.load %arg7[%c0_28, %c0_29] : memref<1x32xf32, #tpu.memory_space<vmem>>, vector<1x32xf32>
    %cst_30 = arith.constant dense<0.000000e+00> : vector<16xf32>
    %57 = vector.multi_reduction <add>, %54, %cst_30 [1] : vector<16x32xf32> to vector<16xf32>
    %58 = vector.shape_cast %57 : vector<16xf32> to vector<16x1xf32>
    %cst_31 = arith.constant 3.200000e+01 : f32
    %59 = vector.broadcast %cst_31 : f32 to vector<16x1xf32>
    %60 = arith.divf %58, %59 : vector<16x1xf32>
    %61 = vector.broadcast %60 : vector<16x1xf32> to vector<16x32xf32>
    %62 = arith.subf %54, %61 : vector<16x32xf32>
    %63 = arith.mulf %62, %62 : vector<16x32xf32>
    %cst_32 = arith.constant dense<0.000000e+00> : vector<16xf32>
    %64 = vector.multi_reduction <add>, %63, %cst_32 [1] : vector<16x32xf32> to vector<16xf32>
    %65 = vector.shape_cast %64 : vector<16xf32> to vector<16x1xf32>
    %cst_33 = arith.constant 3.200000e+01 : f32
    %66 = vector.broadcast %cst_33 : f32 to vector<16x1xf32>
    %67 = arith.divf %65, %66 : vector<16x1xf32>
    %68 = vector.broadcast %60 : vector<16x1xf32> to vector<16x32xf32>
    %69 = arith.subf %54, %68 : vector<16x32xf32>
    %cst_34 = arith.constant 9.99999974E-6 : f32
    %70 = vector.broadcast %cst_34 : f32 to vector<16x1xf32>
    %71 = arith.addf %67, %70 : vector<16x1xf32>
    %72 = math.rsqrt %71 : vector<16x1xf32>
    %73 = vector.broadcast %72 : vector<16x1xf32> to vector<16x32xf32>
    %74 = arith.mulf %69, %73 : vector<16x32xf32>
    %75 = vector.broadcast %55 : vector<1x32xf32> to vector<16x32xf32>
    %76 = arith.mulf %74, %75 : vector<16x32xf32>
    %77 = vector.broadcast %56 : vector<1x32xf32> to vector<16x32xf32>
    %78 = arith.addf %76, %77 : vector<16x32xf32>
    %79 = arith.truncf %78 : vector<16x32xf32> to vector<16x32xbf16>
    %c0_35 = arith.constant 0 : index
    %c0_36 = arith.constant 0 : index
    %80 = vector.load %arg8[%c0_35, %c0_36] : memref<16x32xbf16, #tpu.memory_space<vmem>>, vector<16x32xbf16>
    tpu.vector_store %arg8[%c0_35, %c0_36], %79 {strides = array<i32>} : memref<16x32xbf16, #tpu.memory_space<vmem>>, vector<16x32xbf16>,
    return
  }
  func.func @transform_0(%arg0: i32) -> (i32, i32) {
    %c0_i32 = arith.constant 0 : i32
    %c0_i32_0 = arith.constant 0 : i32
    return %arg0, %c0_i32 : i32, i32
  }
  func.func @transform_1(%arg0: i32) -> (i32, i32) {
    %c0_i32 = arith.constant 0 : i32
    %c0_i32_0 = arith.constant 0 : i32
    %c0_i32_1 = arith.constant 0 : i32
    return %c0_i32, %c0_i32_0 : i32, i32
  }
  func.func @transform_2(%arg0: i32) -> (i32, i32) {
    %c0_i32 = arith.constant 0 : i32
    %c0_i32_0 = arith.constant 0 : i32
    %c0_i32_1 = arith.constant 0 : i32
    return %c0_i32, %c0_i32_0 : i32, i32
  }
  func.func @transform_3(%arg0: i32) -> (i32, i32) {
    %c0_i32 = arith.constant 0 : i32
    %c0_i32_0 = arith.constant 0 : i32
    %c0_i32_1 = arith.constant 0 : i32
    return %c0_i32, %c0_i32_0 : i32, i32
  }
  func.func @transform_4(%arg0: i32) -> (i32, i32) {
    %c0_i32 = arith.constant 0 : i32
    %c0_i32_0 = arith.constant 0 : i32
    %c0_i32_1 = arith.constant 0 : i32
    return %c0_i32, %c0_i32_0 : i32, i32
  }
  func.func @transform_5(%arg0: i32) -> (i32, i32) {
    %c0_i32 = arith.constant 0 : i32
    %c0_i32_0 = arith.constant 0 : i32
    %c0_i32_1 = arith.constant 0 : i32
    return %c0_i32, %c0_i32_0 : i32, i32
  }
  func.func @transform_6(%arg0: i32) -> (i32, i32) {
    %c0_i32 = arith.constant 0 : i32
    %c0_i32_0 = arith.constant 0 : i32
    %c0_i32_1 = arith.constant 0 : i32
    return %c0_i32, %c0_i32_0 : i32, i32
  }
  func.func @transform_7(%arg0: i32) -> (i32, i32) {
    %c0_i32 = arith.constant 0 : i32
    %c0_i32_0 = arith.constant 0 : i32
    return %arg0, %c0_i32 : i32, i32
  }
}

module attributes {stable_mosaic.version = 11 : i64} {
  func.func @attn_block_kernel(%arg0: i32, %arg1: memref<1x8x32xbf16, #tpu.memory_space<vmem>>, %arg2: memref<1x1x8xf32, #tpu.memory_space<vmem>>, %arg3: memref<1x1x8xf32, #tpu.memory_space<vmem>>, %arg4: memref<32x96xbf16, #tpu.memory_space<vmem>>, %arg5: memref<1x96xf32, #tpu.memory_space<vmem>>, %arg6: memref<4x8x32xbf16, #tpu.memory_space<vmem>>, %arg7: memref<1x32xf32, #tpu.memory_space<vmem>>, %arg8: memref<1x32xf32, #tpu.memory_space<vmem>>, %arg9: memref<1x32xf32, #tpu.memory_space<vmem>>, %arg10: memref<1x8x32xbf16, #tpu.memory_space<vmem>>, %arg11: memref<8x96xf32, #tpu.memory_space<vmem>>, %arg12: memref<8x32xf32, #tpu.memory_space<vmem>>) attributes {dimension_semantics = [#tpu.dimension_semantics<parallel>], iteration_bounds = array<i64: 2>, scalar_prefetch = 0 : i64, scratch_operands = 2 : i64, tpu.core_type = #tpu.core_type<tc>, window_params = [{transform_indices = @transform_0, window_bounds = array<i64: 1, 8, 32>}, {transform_indices = @transform_1, window_bounds = array<i64: 1, 1, 8>}, {transform_indices = @transform_2, window_bounds = array<i64: 1, 1, 8>}, {pipeline_mode = #tpu.pipeline_mode<synchronous>, transform_indices = @transform_3, window_bounds = array<i64: 32, 96>}, {pipeline_mode = #tpu.pipeline_mode<synchronous>, transform_indices = @transform_4, window_bounds = array<i64: 1, 96>}, {pipeline_mode = #tpu.pipeline_mode<synchronous>, transform_indices = @transform_5, window_bounds = array<i64: 4, 8, 32>}, {pipeline_mode = #tpu.pipeline_mode<synchronous>, transform_indices = @transform_6, window_bounds = array<i64: 1, 32>}, {pipeline_mode = #tpu.pipeline_mode<synchronous>, transform_indices = @transform_7, window_bounds = array<i64: 1, 32>}, {pipeline_mode = #tpu.pipeline_mode<synchronous>, transform_indices = @transform_8, window_bounds = array<i64: 1, 32>}, {transform_indices = @transform_9, window_bounds = array<i64: 1, 8, 32>}]} {
    %c0 = arith.constant 0 : index
    %c0_0 = arith.constant 0 : index
    %c0_1 = arith.constant 0 : index
    %0 = vector.load %arg1[%c0, %c0_0, %c0_1] : memref<1x8x32xbf16, #tpu.memory_space<vmem>>, vector<1x8x32xbf16>
    %1 = vector.shape_cast %0 : vector<1x8x32xbf16> to vector<8x32xbf16>
    %c0_2 = arith.constant 0 : index
    %c0_3 = arith.constant 0 : index
    %2 = vector.load %arg4[%c0_2, %c0_3] : memref<32x96xbf16, #tpu.memory_space<vmem>>, vector<32x96xbf16>
    %cst = arith.constant dense<0.000000e+00> : vector<8x96xf32>
    %3 = tpu.matmul %1, %2, %cst {dimension_numbers = #tpu.dot_dimension_numbers<[1], [0], [0], [1], [0, 0, 1, 1], [], []>} : vector<8x32xbf16>, vector<32x96xbf16>, vector<8x96xf32> -> vector<8x96xf32>
    %c0_4 = arith.constant 0 : index
    %c0_5 = arith.constant 0 : index
    %4 = vector.load %arg5[%c0_4, %c0_5] : memref<1x96xf32, #tpu.memory_space<vmem>>, vector<1x96xf32>
    %5 = vector.broadcast %4 : vector<1x96xf32> to vector<8x96xf32>
    %6 = arith.addf %3, %5 : vector<8x96xf32>
    %c0_6 = arith.constant 0 : index
    %c0_7 = arith.constant 0 : index
    %7 = vector.load %arg11[%c0_6, %c0_7] : memref<8x96xf32, #tpu.memory_space<vmem>>, vector<8x96xf32>
    tpu.vector_store %arg11[%c0_6, %c0_7], %6 {strides = array<i32>} : memref<8x96xf32, #tpu.memory_space<vmem>>, vector<8x96xf32>,
    %8 = tpu.iota {dimensions = array<i32: 0>} : vector<8x8xi32>
    %9 = tpu.iota {dimensions = array<i32: 1>} : vector<8x8xi32>
    %c0_8 = arith.constant 0 : index
    %c0_9 = arith.constant 0 : index
    %c0_10 = arith.constant 0 : index
    %10 = vector.load %arg2[%c0_8, %c0_9, %c0_10] : memref<1x1x8xf32, #tpu.memory_space<vmem>>, vector<1x1x8xf32>
    %11 = vector.shape_cast %10 : vector<1x1x8xf32> to vector<1x8xf32>
    %c0_11 = arith.constant 0 : index
    %c0_12 = arith.constant 0 : index
    %c0_13 = arith.constant 0 : index
    %12 = vector.load %arg3[%c0_11, %c0_12, %c0_13] : memref<1x1x8xf32, #tpu.memory_space<vmem>>, vector<1x1x8xf32>
    %13 = vector.shape_cast %12 : vector<1x1x8xf32> to vector<1x8xf32>
    %14 = arith.cmpi sle, %9, %8 : vector<8x8xi32>
    %cst_14 = arith.constant 0.000000e+00 : f32
    %15 = vector.shape_cast %11 : vector<1x8xf32> to vector<1x8xf32>
    %16 = vector.broadcast %15 : vector<1x8xf32> to vector<8x8xf32>
    %17 = vector.broadcast %cst_14 : f32 to vector<8x8xf32>
    %18 = arith.select %14, %16, %17 : vector<8x8xi1>, vector<8x8xf32>
    %19 = vector.broadcast %13 : vector<1x8xf32> to vector<8x8xf32>
    %20 = arith.addf %18, %19 : vector<8x8xf32>
    %cst_15 = arith.constant 0.000000e+00 : f32
    %cst_16 = arith.constant 1.000000e+00 : f32
    %21 = vector.broadcast %cst_15 : f32 to vector<8x8xf32>
    %22 = arith.maximumf %21, %20 : vector<8x8xf32>
    %23 = vector.broadcast %cst_16 : f32 to vector<8x8xf32>
    %24 = arith.minimumf %23, %22 : vector<8x8xf32>
    %cst_17 = arith.constant 1.000000e+00 : f32
    %25 = vector.broadcast %cst_17 : f32 to vector<8x8xf32>
    %26 = arith.subf %25, %24 : vector<8x8xf32>
    %cst_18 = arith.constant -1.000000e+04 : f32
    %27 = vector.broadcast %cst_18 : f32 to vector<8x8xf32>
    %28 = arith.mulf %26, %27 : vector<8x8xf32>
    %29 = arith.extf %1 : vector<8x32xbf16> to vector<8x32xf32>
    %c0_19 = arith.constant 0 : index
    %c0_20 = arith.constant 0 : index
    %30 = vector.load %arg7[%c0_19, %c0_20] : memref<1x32xf32, #tpu.memory_space<vmem>>, vector<1x32xf32>
    %31 = vector.broadcast %30 : vector<1x32xf32> to vector<8x32xf32>
    %32 = arith.addf %29, %31 : vector<8x32xf32>
    %c0_21 = arith.constant 0 : index
    %c0_22 = arith.constant 0 : index
    %33 = vector.load %arg12[%c0_21, %c0_22] : memref<8x32xf32, #tpu.memory_space<vmem>>, vector<8x32xf32>
    tpu.vector_store %arg12[%c0_21, %c0_22], %32 {strides = array<i32>} : memref<8x32xf32, #tpu.memory_space<vmem>>, vector<8x32xf32>,
    %c0_23 = arith.constant 0 : index
    %c0_24 = arith.constant 0 : index
    %34 = vector.load %arg11[%c0_23, %c0_24] : memref<8x96xf32, #tpu.memory_space<vmem>>, vector<8x8xf32>
    %35 = arith.truncf %34 : vector<8x8xf32> to vector<8x8xbf16>
    %c0_25 = arith.constant 0 : index
    %c32 = arith.constant 32 : index
    %36 = vector.load %arg11[%c0_25, %c32] : memref<8x96xf32, #tpu.memory_space<vmem>>, vector<8x8xf32>
    %37 = arith.truncf %36 : vector<8x8xf32> to vector<8x8xbf16>
    %c0_26 = arith.constant 0 : index
    %c64 = arith.constant 64 : index
    %38 = vector.load %arg11[%c0_26, %c64] : memref<8x96xf32, #tpu.memory_space<vmem>>, vector<8x8xf32>
    %39 = arith.truncf %38 : vector<8x8xf32> to vector<8x8xbf16>
    %cst_27 = arith.constant dense<0.000000e+00> : vector<8x8xf32>
    %40 = tpu.matmul %35, %37, %cst_27 {dimension_numbers = #tpu.dot_dimension_numbers<[1], [1], [0], [0], [0, 0, 1, 0], [], []>} : vector<8x8xbf16>, vector<8x8xbf16>, vector<8x8xf32> -> vector<8x8xf32>
    %41 = arith.addf %40, %28 : vector<8x8xf32>
    %cst_28 = arith.constant dense<0xFF800000> : vector<8xf32>
    %42 = vector.multi_reduction <maximumf>, %41, %cst_28 [1] : vector<8x8xf32> to vector<8xf32>
    %43 = vector.shape_cast %42 : vector<8xf32> to vector<8x1xf32>
    %44 = vector.broadcast %43 : vector<8x1xf32> to vector<8x8xf32>
    %45 = arith.subf %41, %44 : vector<8x8xf32>
    %46 = math.exp %45 : vector<8x8xf32>
    %cst_29 = arith.constant dense<0.000000e+00> : vector<8xf32>
    %47 = vector.multi_reduction <add>, %46, %cst_29 [1] : vector<8x8xf32> to vector<8xf32>
    %48 = vector.shape_cast %47 : vector<8xf32> to vector<8x1xf32>
    %49 = arith.truncf %46 : vector<8x8xf32> to vector<8x8xbf16>
    %cst_30 = arith.constant dense<0.000000e+00> : vector<8x8xf32>
    %50 = tpu.matmul %49, %39, %cst_30 {dimension_numbers = #tpu.dot_dimension_numbers<[1], [0], [0], [1], [0, 0, 1, 1], [], []>} : vector<8x8xbf16>, vector<8x8xbf16>, vector<8x8xf32> -> vector<8x8xf32>
    %51 = tpu.reciprocal %48 {approx = true} : vector<8x1xf32> -> vector<8x1xf32>
    %52 = vector.broadcast %51 : vector<8x1xf32> to vector<8x8xf32>
    %53 = arith.mulf %50, %52 : vector<8x8xf32>
    %c0_31 = arith.constant 0 : index
    %c0_32 = arith.constant 0 : index
    %54 = vector.load %arg12[%c0_31, %c0_32] : memref<8x32xf32, #tpu.memory_space<vmem>>, vector<8x32xf32>
    %55 = arith.truncf %53 : vector<8x8xf32> to vector<8x8xbf16>
    %c0_33 = arith.constant 0 : index
    %c0_34 = arith.constant 0 : index
    %c0_35 = arith.constant 0 : index
    %56 = vector.load %arg6[%c0_33, %c0_34, %c0_35] : memref<4x8x32xbf16, #tpu.memory_space<vmem>>, vector<1x8x32xbf16>
    %57 = vector.shape_cast %56 : vector<1x8x32xbf16> to vector<8x32xbf16>
    %cst_36 = arith.constant dense<0.000000e+00> : vector<8x32xf32>
    %58 = tpu.matmul %55, %57, %cst_36 {dimension_numbers = #tpu.dot_dimension_numbers<[1], [0], [0], [1], [0, 0, 1, 1], [], []>} : vector<8x8xbf16>, vector<8x32xbf16>, vector<8x32xf32> -> vector<8x32xf32>
    %59 = arith.addf %54, %58 : vector<8x32xf32>
    %c0_37 = arith.constant 0 : index
    %c0_38 = arith.constant 0 : index
    %60 = vector.load %arg12[%c0_37, %c0_38] : memref<8x32xf32, #tpu.memory_space<vmem>>, vector<8x32xf32>
    tpu.vector_store %arg12[%c0_37, %c0_38], %59 {strides = array<i32>} : memref<8x32xf32, #tpu.memory_space<vmem>>, vector<8x32xf32>,
    %c0_39 = arith.constant 0 : index
    %c8 = arith.constant 8 : index
    %61 = vector.load %arg11[%c0_39, %c8] : memref<8x96xf32, #tpu.memory_space<vmem>>, vector<8x8xf32>
    %62 = arith.truncf %61 : vector<8x8xf32> to vector<8x8xbf16>
    %c0_40 = arith.constant 0 : index
    %c40 = arith.constant 40 : index
    %63 = vector.load %arg11[%c0_40, %c40] : memref<8x96xf32, #tpu.memory_space<vmem>>, vector<8x8xf32>
    %64 = arith.truncf %63 : vector<8x8xf32> to vector<8x8xbf16>
    %c0_41 = arith.constant 0 : index
    %c72 = arith.constant 72 : index
    %65 = vector.load %arg11[%c0_41, %c72] : memref<8x96xf32, #tpu.memory_space<vmem>>, vector<8x8xf32>
    %66 = arith.truncf %65 : vector<8x8xf32> to vector<8x8xbf16>
    %cst_42 = arith.constant dense<0.000000e+00> : vector<8x8xf32>
    %67 = tpu.matmul %62, %64, %cst_42 {dimension_numbers = #tpu.dot_dimension_numbers<[1], [1], [0], [0], [0, 0, 1, 0], [], []>} : vector<8x8xbf16>, vector<8x8xbf16>, vector<8x8xf32> -> vector<8x8xf32>
    %68 = arith.addf %67, %28 : vector<8x8xf32>
    %cst_43 = arith.constant dense<0xFF800000> : vector<8xf32>
    %69 = vector.multi_reduction <maximumf>, %68, %cst_43 [1] : vector<8x8xf32> to vector<8xf32>
    %70 = vector.shape_cast %69 : vector<8xf32> to vector<8x1xf32>
    %71 = vector.broadcast %70 : vector<8x1xf32> to vector<8x8xf32>
    %72 = arith.subf %68, %71 : vector<8x8xf32>
    %73 = math.exp %72 : vector<8x8xf32>
    %cst_44 = arith.constant dense<0.000000e+00> : vector<8xf32>
    %74 = vector.multi_reduction <add>, %73, %cst_44 [1] : vector<8x8xf32> to vector<8xf32>
    %75 = vector.shape_cast %74 : vector<8xf32> to vector<8x1xf32>
    %76 = arith.truncf %73 : vector<8x8xf32> to vector<8x8xbf16>
    %cst_45 = arith.constant dense<0.000000e+00> : vector<8x8xf32>
    %77 = tpu.matmul %76, %66, %cst_45 {dimension_numbers = #tpu.dot_dimension_numbers<[1], [0], [0], [1], [0, 0, 1, 1], [], []>} : vector<8x8xbf16>, vector<8x8xbf16>, vector<8x8xf32> -> vector<8x8xf32>
    %78 = tpu.reciprocal %75 {approx = true} : vector<8x1xf32> -> vector<8x1xf32>
    %79 = vector.broadcast %78 : vector<8x1xf32> to vector<8x8xf32>
    %80 = arith.mulf %77, %79 : vector<8x8xf32>
    %c0_46 = arith.constant 0 : index
    %c0_47 = arith.constant 0 : index
    %81 = vector.load %arg12[%c0_46, %c0_47] : memref<8x32xf32, #tpu.memory_space<vmem>>, vector<8x32xf32>
    %82 = arith.truncf %80 : vector<8x8xf32> to vector<8x8xbf16>
    %c1 = arith.constant 1 : index
    %c0_48 = arith.constant 0 : index
    %c0_49 = arith.constant 0 : index
    %83 = vector.load %arg6[%c1, %c0_48, %c0_49] : memref<4x8x32xbf16, #tpu.memory_space<vmem>>, vector<1x8x32xbf16>
    %84 = vector.shape_cast %83 : vector<1x8x32xbf16> to vector<8x32xbf16>
    %cst_50 = arith.constant dense<0.000000e+00> : vector<8x32xf32>
    %85 = tpu.matmul %82, %84, %cst_50 {dimension_numbers = #tpu.dot_dimension_numbers<[1], [0], [0], [1], [0, 0, 1, 1], [], []>} : vector<8x8xbf16>, vector<8x32xbf16>, vector<8x32xf32> -> vector<8x32xf32>
    %86 = arith.addf %81, %85 : vector<8x32xf32>
    %c0_51 = arith.constant 0 : index
    %c0_52 = arith.constant 0 : index
    %87 = vector.load %arg12[%c0_51, %c0_52] : memref<8x32xf32, #tpu.memory_space<vmem>>, vector<8x32xf32>
    tpu.vector_store %arg12[%c0_51, %c0_52], %86 {strides = array<i32>} : memref<8x32xf32, #tpu.memory_space<vmem>>, vector<8x32xf32>,
    %c0_53 = arith.constant 0 : index
    %c16 = arith.constant 16 : index
    %88 = vector.load %arg11[%c0_53, %c16] : memref<8x96xf32, #tpu.memory_space<vmem>>, vector<8x8xf32>
    %89 = arith.truncf %88 : vector<8x8xf32> to vector<8x8xbf16>
    %c0_54 = arith.constant 0 : index
    %c48 = arith.constant 48 : index
    %90 = vector.load %arg11[%c0_54, %c48] : memref<8x96xf32, #tpu.memory_space<vmem>>, vector<8x8xf32>
    %91 = arith.truncf %90 : vector<8x8xf32> to vector<8x8xbf16>
    %c0_55 = arith.constant 0 : index
    %c80 = arith.constant 80 : index
    %92 = vector.load %arg11[%c0_55, %c80] : memref<8x96xf32, #tpu.memory_space<vmem>>, vector<8x8xf32>
    %93 = arith.truncf %92 : vector<8x8xf32> to vector<8x8xbf16>
    %cst_56 = arith.constant dense<0.000000e+00> : vector<8x8xf32>
    %94 = tpu.matmul %89, %91, %cst_56 {dimension_numbers = #tpu.dot_dimension_numbers<[1], [1], [0], [0], [0, 0, 1, 0], [], []>} : vector<8x8xbf16>, vector<8x8xbf16>, vector<8x8xf32> -> vector<8x8xf32>
    %95 = arith.addf %94, %28 : vector<8x8xf32>
    %cst_57 = arith.constant dense<0xFF800000> : vector<8xf32>
    %96 = vector.multi_reduction <maximumf>, %95, %cst_57 [1] : vector<8x8xf32> to vector<8xf32>
    %97 = vector.shape_cast %96 : vector<8xf32> to vector<8x1xf32>
    %98 = vector.broadcast %97 : vector<8x1xf32> to vector<8x8xf32>
    %99 = arith.subf %95, %98 : vector<8x8xf32>
    %100 = math.exp %99 : vector<8x8xf32>
    %cst_58 = arith.constant dense<0.000000e+00> : vector<8xf32>
    %101 = vector.multi_reduction <add>, %100, %cst_58 [1] : vector<8x8xf32> to vector<8xf32>
    %102 = vector.shape_cast %101 : vector<8xf32> to vector<8x1xf32>
    %103 = arith.truncf %100 : vector<8x8xf32> to vector<8x8xbf16>
    %cst_59 = arith.constant dense<0.000000e+00> : vector<8x8xf32>
    %104 = tpu.matmul %103, %93, %cst_59 {dimension_numbers = #tpu.dot_dimension_numbers<[1], [0], [0], [1], [0, 0, 1, 1], [], []>} : vector<8x8xbf16>, vector<8x8xbf16>, vector<8x8xf32> -> vector<8x8xf32>
    %105 = tpu.reciprocal %102 {approx = true} : vector<8x1xf32> -> vector<8x1xf32>
    %106 = vector.broadcast %105 : vector<8x1xf32> to vector<8x8xf32>
    %107 = arith.mulf %104, %106 : vector<8x8xf32>
    %c0_60 = arith.constant 0 : index
    %c0_61 = arith.constant 0 : index
    %108 = vector.load %arg12[%c0_60, %c0_61] : memref<8x32xf32, #tpu.memory_space<vmem>>, vector<8x32xf32>
    %109 = arith.truncf %107 : vector<8x8xf32> to vector<8x8xbf16>
    %c2 = arith.constant 2 : index
    %c0_62 = arith.constant 0 : index
    %c0_63 = arith.constant 0 : index
    %110 = vector.load %arg6[%c2, %c0_62, %c0_63] : memref<4x8x32xbf16, #tpu.memory_space<vmem>>, vector<1x8x32xbf16>
    %111 = vector.shape_cast %110 : vector<1x8x32xbf16> to vector<8x32xbf16>
    %cst_64 = arith.constant dense<0.000000e+00> : vector<8x32xf32>
    %112 = tpu.matmul %109, %111, %cst_64 {dimension_numbers = #tpu.dot_dimension_numbers<[1], [0], [0], [1], [0, 0, 1, 1], [], []>} : vector<8x8xbf16>, vector<8x32xbf16>, vector<8x32xf32> -> vector<8x32xf32>
    %113 = arith.addf %108, %112 : vector<8x32xf32>
    %c0_65 = arith.constant 0 : index
    %c0_66 = arith.constant 0 : index
    %114 = vector.load %arg12[%c0_65, %c0_66] : memref<8x32xf32, #tpu.memory_space<vmem>>, vector<8x32xf32>
    tpu.vector_store %arg12[%c0_65, %c0_66], %113 {strides = array<i32>} : memref<8x32xf32, #tpu.memory_space<vmem>>, vector<8x32xf32>,
    %c0_67 = arith.constant 0 : index
    %c24 = arith.constant 24 : index
    %115 = vector.load %arg11[%c0_67, %c24] : memref<8x96xf32, #tpu.memory_space<vmem>>, vector<8x8xf32>
    %116 = arith.truncf %115 : vector<8x8xf32> to vector<8x8xbf16>
    %c0_68 = arith.constant 0 : index
    %c56 = arith.constant 56 : index
    %117 = vector.load %arg11[%c0_68, %c56] : memref<8x96xf32, #tpu.memory_space<vmem>>, vector<8x8xf32>
    %118 = arith.truncf %117 : vector<8x8xf32> to vector<8x8xbf16>
    %c0_69 = arith.constant 0 : index
    %c88 = arith.constant 88 : index
    %119 = vector.load %arg11[%c0_69, %c88] : memref<8x96xf32, #tpu.memory_space<vmem>>, vector<8x8xf32>
    %120 = arith.truncf %119 : vector<8x8xf32> to vector<8x8xbf16>
    %cst_70 = arith.constant dense<0.000000e+00> : vector<8x8xf32>
    %121 = tpu.matmul %116, %118, %cst_70 {dimension_numbers = #tpu.dot_dimension_numbers<[1], [1], [0], [0], [0, 0, 1, 0], [], []>} : vector<8x8xbf16>, vector<8x8xbf16>, vector<8x8xf32> -> vector<8x8xf32>
    %122 = arith.addf %121, %28 : vector<8x8xf32>
    %cst_71 = arith.constant dense<0xFF800000> : vector<8xf32>
    %123 = vector.multi_reduction <maximumf>, %122, %cst_71 [1] : vector<8x8xf32> to vector<8xf32>
    %124 = vector.shape_cast %123 : vector<8xf32> to vector<8x1xf32>
    %125 = vector.broadcast %124 : vector<8x1xf32> to vector<8x8xf32>
    %126 = arith.subf %122, %125 : vector<8x8xf32>
    %127 = math.exp %126 : vector<8x8xf32>
    %cst_72 = arith.constant dense<0.000000e+00> : vector<8xf32>
    %128 = vector.multi_reduction <add>, %127, %cst_72 [1] : vector<8x8xf32> to vector<8xf32>
    %129 = vector.shape_cast %128 : vector<8xf32> to vector<8x1xf32>
    %130 = arith.truncf %127 : vector<8x8xf32> to vector<8x8xbf16>
    %cst_73 = arith.constant dense<0.000000e+00> : vector<8x8xf32>
    %131 = tpu.matmul %130, %120, %cst_73 {dimension_numbers = #tpu.dot_dimension_numbers<[1], [0], [0], [1], [0, 0, 1, 1], [], []>} : vector<8x8xbf16>, vector<8x8xbf16>, vector<8x8xf32> -> vector<8x8xf32>
    %132 = tpu.reciprocal %129 {approx = true} : vector<8x1xf32> -> vector<8x1xf32>
    %133 = vector.broadcast %132 : vector<8x1xf32> to vector<8x8xf32>
    %134 = arith.mulf %131, %133 : vector<8x8xf32>
    %c0_74 = arith.constant 0 : index
    %c0_75 = arith.constant 0 : index
    %135 = vector.load %arg12[%c0_74, %c0_75] : memref<8x32xf32, #tpu.memory_space<vmem>>, vector<8x32xf32>
    %136 = arith.truncf %134 : vector<8x8xf32> to vector<8x8xbf16>
    %c3 = arith.constant 3 : index
    %c0_76 = arith.constant 0 : index
    %c0_77 = arith.constant 0 : index
    %137 = vector.load %arg6[%c3, %c0_76, %c0_77] : memref<4x8x32xbf16, #tpu.memory_space<vmem>>, vector<1x8x32xbf16>
    %138 = vector.shape_cast %137 : vector<1x8x32xbf16> to vector<8x32xbf16>
    %cst_78 = arith.constant dense<0.000000e+00> : vector<8x32xf32>
    %139 = tpu.matmul %136, %138, %cst_78 {dimension_numbers = #tpu.dot_dimension_numbers<[1], [0], [0], [1], [0, 0, 1, 1], [], []>} : vector<8x8xbf16>, vector<8x32xbf16>, vector<8x32xf32> -> vector<8x32xf32>
    %140 = arith.addf %135, %139 : vector<8x32xf32>
    %c0_79 = arith.constant 0 : index
    %c0_80 = arith.constant 0 : index
    %141 = vector.load %arg12[%c0_79, %c0_80] : memref<8x32xf32, #tpu.memory_space<vmem>>, vector<8x32xf32>
    tpu.vector_store %arg12[%c0_79, %c0_80], %140 {strides = array<i32>} : memref<8x32xf32, #tpu.memory_space<vmem>>, vector<8x32xf32>,
    %c0_81 = arith.constant 0 : index
    %c0_82 = arith.constant 0 : index
    %142 = vector.load %arg12[%c0_81, %c0_82] : memref<8x32xf32, #tpu.memory_space<vmem>>, vector<8x32xf32>
    %c0_83 = arith.constant 0 : index
    %c0_84 = arith.constant 0 : index
    %143 = vector.load %arg8[%c0_83, %c0_84] : memref<1x32xf32, #tpu.memory_space<vmem>>, vector<1x32xf32>
    %c0_85 = arith.constant 0 : index
    %c0_86 = arith.constant 0 : index
    %144 = vector.load %arg9[%c0_85, %c0_86] : memref<1x32xf32, #tpu.memory_space<vmem>>, vector<1x32xf32>
    %cst_87 = arith.constant dense<0.000000e+00> : vector<8xf32>
    %145 = vector.multi_reduction <add>, %142, %cst_87 [1] : vector<8x32xf32> to vector<8xf32>
    %146 = vector.shape_cast %145 : vector<8xf32> to vector<8x1xf32>
    %cst_88 = arith.constant 3.200000e+01 : f32
    %147 = vector.broadcast %cst_88 : f32 to vector<8x1xf32>
    %148 = arith.divf %146, %147 : vector<8x1xf32>
    %149 = vector.broadcast %148 : vector<8x1xf32> to vector<8x32xf32>
    %150 = arith.subf %142, %149 : vector<8x32xf32>
    %151 = arith.mulf %150, %150 : vector<8x32xf32>
    %cst_89 = arith.constant dense<0.000000e+00> : vector<8xf32>
    %152 = vector.multi_reduction <add>, %151, %cst_89 [1] : vector<8x32xf32> to vector<8xf32>
    %153 = vector.shape_cast %152 : vector<8xf32> to vector<8x1xf32>
    %cst_90 = arith.constant 3.200000e+01 : f32
    %154 = vector.broadcast %cst_90 : f32 to vector<8x1xf32>
    %155 = arith.divf %153, %154 : vector<8x1xf32>
    %156 = vector.broadcast %148 : vector<8x1xf32> to vector<8x32xf32>
    %157 = arith.subf %142, %156 : vector<8x32xf32>
    %cst_91 = arith.constant 9.99999974E-6 : f32
    %158 = vector.broadcast %cst_91 : f32 to vector<8x1xf32>
    %159 = arith.addf %155, %158 : vector<8x1xf32>
    %160 = math.rsqrt %159 : vector<8x1xf32>
    %161 = vector.broadcast %160 : vector<8x1xf32> to vector<8x32xf32>
    %162 = arith.mulf %157, %161 : vector<8x32xf32>
    %163 = vector.broadcast %143 : vector<1x32xf32> to vector<8x32xf32>
    %164 = arith.mulf %162, %163 : vector<8x32xf32>
    %165 = vector.broadcast %144 : vector<1x32xf32> to vector<8x32xf32>
    %166 = arith.addf %164, %165 : vector<8x32xf32>
    %167 = arith.truncf %166 : vector<8x32xf32> to vector<8x32xbf16>
    %c0_92 = arith.constant 0 : index
    %c0_93 = arith.constant 0 : index
    %c0_94 = arith.constant 0 : index
    %168 = vector.load %arg10[%c0_92, %c0_93, %c0_94] : memref<1x8x32xbf16, #tpu.memory_space<vmem>>, vector<1x8x32xbf16>
    %169 = vector.shape_cast %168 : vector<1x8x32xbf16> to vector<8x32xbf16>
    %170 = vector.shape_cast %167 : vector<8x32xbf16> to vector<1x8x32xbf16>
    tpu.vector_store %arg10[%c0_92, %c0_93, %c0_94], %170 {strides = array<i32>} : memref<1x8x32xbf16, #tpu.memory_space<vmem>>, vector<1x8x32xbf16>,
    return
  }
  func.func @transform_0(%arg0: i32) -> (i32, i32, i32) {
    %c0_i32 = arith.constant 0 : i32
    %c0_i32_0 = arith.constant 0 : i32
    %c0_i32_1 = arith.constant 0 : i32
    return %arg0, %c0_i32, %c0_i32_0 : i32, i32, i32
  }
  func.func @transform_1(%arg0: i32) -> (i32, i32, i32) {
    %c0_i32 = arith.constant 0 : i32
    %c0_i32_0 = arith.constant 0 : i32
    %c0_i32_1 = arith.constant 0 : i32
    return %arg0, %c0_i32, %c0_i32_0 : i32, i32, i32
  }
  func.func @transform_2(%arg0: i32) -> (i32, i32, i32) {
    %c0_i32 = arith.constant 0 : i32
    %c0_i32_0 = arith.constant 0 : i32
    %c0_i32_1 = arith.constant 0 : i32
    return %arg0, %c0_i32, %c0_i32_0 : i32, i32, i32
  }
  func.func @transform_3(%arg0: i32) -> (i32, i32) {
    %c0_i32 = arith.constant 0 : i32
    %c0_i32_0 = arith.constant 0 : i32
    %c0_i32_1 = arith.constant 0 : i32
    return %c0_i32, %c0_i32_0 : i32, i32
  }
  func.func @transform_4(%arg0: i32) -> (i32, i32) {
    %c0_i32 = arith.constant 0 : i32
    %c0_i32_0 = arith.constant 0 : i32
    %c0_i32_1 = arith.constant 0 : i32
    return %c0_i32, %c0_i32_0 : i32, i32
  }
  func.func @transform_5(%arg0: i32) -> (i32, i32, i32) {
    %c0_i32 = arith.constant 0 : i32
    %c0_i32_0 = arith.constant 0 : i32
    %c0_i32_1 = arith.constant 0 : i32
    %c0_i32_2 = arith.constant 0 : i32
    return %c0_i32, %c0_i32_0, %c0_i32_1 : i32, i32, i32
  }
  func.func @transform_6(%arg0: i32) -> (i32, i32) {
    %c0_i32 = arith.constant 0 : i32
    %c0_i32_0 = arith.constant 0 : i32
    %c0_i32_1 = arith.constant 0 : i32
    return %c0_i32, %c0_i32_0 : i32, i32
  }
  func.func @transform_7(%arg0: i32) -> (i32, i32) {
    %c0_i32 = arith.constant 0 : i32
    %c0_i32_0 = arith.constant 0 : i32
    %c0_i32_1 = arith.constant 0 : i32
    return %c0_i32, %c0_i32_0 : i32, i32
  }
  func.func @transform_8(%arg0: i32) -> (i32, i32) {
    %c0_i32 = arith.constant 0 : i32
    %c0_i32_0 = arith.constant 0 : i32
    %c0_i32_1 = arith.constant 0 : i32
    return %c0_i32, %c0_i32_0 : i32, i32
  }
  func.func @transform_9(%arg0: i32) -> (i32, i32, i32) {
    %c0_i32 = arith.constant 0 : i32
    %c0_i32_0 = arith.constant 0 : i32
    %c0_i32_1 = arith.constant 0 : i32
    return %arg0, %c0_i32, %c0_i32_0 : i32, i32, i32
  }
}

module attributes {stable_mosaic.version = 11 : i64} {
  func.func @mlm_head_kernel(%arg0: i32, %arg1: memref<4x32xbf16, #tpu.memory_space<vmem>>, %arg2: memref<32x32xbf16, #tpu.memory_space<vmem>>, %arg3: memref<1x32xf32, #tpu.memory_space<vmem>>, %arg4: memref<1x32xf32, #tpu.memory_space<vmem>>, %arg5: memref<1x32xf32, #tpu.memory_space<vmem>>, %arg6: memref<64x32xbf16, #tpu.memory_space<vmem>>, %arg7: memref<4x64xf32, #tpu.memory_space<vmem>>, %arg8: memref<4x64xf32, #tpu.memory_space<vmem>>, %arg9: memref<4x32xbf16, #tpu.memory_space<vmem>>) attributes {dimension_semantics = [#tpu.dimension_semantics<arbitrary>], iteration_bounds = array<i64: 1>, scalar_prefetch = 0 : i64, scratch_operands = 1 : i64, tpu.core_type = #tpu.core_type<tc>, window_params = [{pipeline_mode = #tpu.pipeline_mode<synchronous>, transform_indices = @transform_0, window_bounds = array<i64: 4, 32>}, {pipeline_mode = #tpu.pipeline_mode<synchronous>, transform_indices = @transform_1, window_bounds = array<i64: 32, 32>}, {pipeline_mode = #tpu.pipeline_mode<synchronous>, transform_indices = @transform_2, window_bounds = array<i64: 1, 32>}, {pipeline_mode = #tpu.pipeline_mode<synchronous>, transform_indices = @transform_3, window_bounds = array<i64: 1, 32>}, {pipeline_mode = #tpu.pipeline_mode<synchronous>, transform_indices = @transform_4, window_bounds = array<i64: 1, 32>}, {transform_indices = @transform_5, window_bounds = array<i64: 64, 32>}, {transform_indices = @transform_6, window_bounds = array<i64: 4, 64>}, {transform_indices = @transform_7, window_bounds = array<i64: 4, 64>}]} {
    %c0_i32 = arith.constant 0 : i32
    %0 = arith.cmpi eq, %arg0, %c0_i32 : i32
    %1 = arith.extui %0 : i1 to i32
    %c0_i32_0 = arith.constant 0 : i32
    %2 = arith.cmpi ne, %1, %c0_i32_0 : i32
    scf.if %2 {
      %c0_8 = arith.constant 0 : index
      %c0_9 = arith.constant 0 : index
      %9 = vector.load %arg1[%c0_8, %c0_9] : memref<4x32xbf16, #tpu.memory_space<vmem>>, vector<4x32xbf16>
      %c0_10 = arith.constant 0 : index
      %c0_11 = arith.constant 0 : index
      %10 = vector.load %arg2[%c0_10, %c0_11] : memref<32x32xbf16, #tpu.memory_space<vmem>>, vector<32x32xbf16>
      %cst_12 = arith.constant dense<0.000000e+00> : vector<4x32xf32>
      %11 = tpu.matmul %9, %10, %cst_12 {dimension_numbers = #tpu.dot_dimension_numbers<[1], [0], [0], [1], [0, 0, 1, 1], [], []>} : vector<4x32xbf16>, vector<32x32xbf16>, vector<4x32xf32> -> vector<4x32xf32>
      %c0_13 = arith.constant 0 : index
      %c0_14 = arith.constant 0 : index
      %12 = vector.load %arg3[%c0_13, %c0_14] : memref<1x32xf32, #tpu.memory_space<vmem>>, vector<1x32xf32>
      %13 = vector.broadcast %12 : vector<1x32xf32> to vector<4x32xf32>
      %14 = arith.addf %11, %13 : vector<4x32xf32>
      %cst_15 = arith.constant 5.000000e-01 : f32
      %15 = vector.broadcast %cst_15 : f32 to vector<4x32xf32>
      %16 = arith.mulf %14, %15 : vector<4x32xf32>
      %cst_16 = arith.constant 0.707106769 : f32
      %17 = vector.broadcast %cst_16 : f32 to vector<4x32xf32>
      %18 = arith.mulf %14, %17 : vector<4x32xf32>
      %cst_17 = arith.constant 0.000000e+00 : f32
      %19 = vector.broadcast %cst_17 : f32 to vector<4x32xf32>
      %20 = arith.cmpf olt, %18, %19 : vector<4x32xf32>
      %cst_18 = arith.constant -1.000000e+00 : f32
      %cst_19 = arith.constant 1.000000e+00 : f32
      %21 = vector.broadcast %cst_18 : f32 to vector<4x32xf32>
      %22 = vector.broadcast %cst_19 : f32 to vector<4x32xf32>
      %23 = arith.select %20, %21, %22 : vector<4x32xi1>, vector<4x32xf32>
      %24 = math.absf %18 : vector<4x32xf32>
      %cst_20 = arith.constant 0.327591091 : f32
      %25 = vector.broadcast %cst_20 : f32 to vector<4x32xf32>
      %26 = arith.mulf %25, %24 : vector<4x32xf32>
      %cst_21 = arith.constant 1.000000e+00 : f32
      %27 = vector.broadcast %cst_21 : f32 to vector<4x32xf32>
      %28 = arith.addf %27, %26 : vector<4x32xf32>
      %cst_22 = arith.constant 1.000000e+00 : f32
      %29 = vector.broadcast %cst_22 : f32 to vector<4x32xf32>
      %30 = arith.divf %29, %28 : vector<4x32xf32>
      %cst_23 = arith.constant 1.06140542 : f32
      %31 = vector.broadcast %cst_23 : f32 to vector<4x32xf32>
      %32 = arith.mulf %31, %30 : vector<4x32xf32>
      %cst_24 = arith.constant -1.45315206 : f32
      %33 = vector.broadcast %cst_24 : f32 to vector<4x32xf32>
      %34 = arith.addf %32, %33 : vector<4x32xf32>
      %35 = arith.mulf %34, %30 : vector<4x32xf32>
      %cst_25 = arith.constant 1.42141378 : f32
      %36 = vector.broadcast %cst_25 : f32 to vector<4x32xf32>
      %37 = arith.addf %35, %36 : vector<4x32xf32>
      %38 = arith.mulf %37, %30 : vector<4x32xf32>
      %cst_26 = arith.constant -0.284496725 : f32
      %39 = vector.broadcast %cst_26 : f32 to vector<4x32xf32>
      %40 = arith.addf %38, %39 : vector<4x32xf32>
      %41 = arith.mulf %40, %30 : vector<4x32xf32>
      %cst_27 = arith.constant 0.254829586 : f32
      %42 = vector.broadcast %cst_27 : f32 to vector<4x32xf32>
      %43 = arith.addf %41, %42 : vector<4x32xf32>
      %44 = arith.mulf %43, %30 : vector<4x32xf32>
      %cst_28 = arith.constant 0.000000e+00 : f32
      %45 = vector.broadcast %cst_28 : f32 to vector<4x32xf32>
      %46 = arith.subf %45, %24 : vector<4x32xf32>
      %47 = arith.mulf %46, %24 : vector<4x32xf32>
      %48 = math.exp %47 : vector<4x32xf32>
      %49 = arith.mulf %44, %48 : vector<4x32xf32>
      %cst_29 = arith.constant 1.000000e+00 : f32
      %50 = vector.broadcast %cst_29 : f32 to vector<4x32xf32>
      %51 = arith.subf %50, %49 : vector<4x32xf32>
      %52 = arith.mulf %23, %51 : vector<4x32xf32>
      %cst_30 = arith.constant 1.000000e+00 : f32
      %53 = vector.broadcast %cst_30 : f32 to vector<4x32xf32>
      %54 = arith.addf %53, %52 : vector<4x32xf32>
      %55 = arith.mulf %16, %54 : vector<4x32xf32>
      %c0_31 = arith.constant 0 : index
      %c0_32 = arith.constant 0 : index
      %56 = vector.load %arg4[%c0_31, %c0_32] : memref<1x32xf32, #tpu.memory_space<vmem>>, vector<1x32xf32>
      %c0_33 = arith.constant 0 : index
      %c0_34 = arith.constant 0 : index
      %57 = vector.load %arg5[%c0_33, %c0_34] : memref<1x32xf32, #tpu.memory_space<vmem>>, vector<1x32xf32>
      %cst_35 = arith.constant dense<0.000000e+00> : vector<4xf32>
      %58 = vector.multi_reduction <add>, %55, %cst_35 [1] : vector<4x32xf32> to vector<4xf32>
      %59 = vector.shape_cast %58 : vector<4xf32> to vector<4x1xf32>
      %cst_36 = arith.constant 3.200000e+01 : f32
      %60 = vector.broadcast %cst_36 : f32 to vector<4x1xf32>
      %61 = arith.divf %59, %60 : vector<4x1xf32>
      %62 = vector.broadcast %61 : vector<4x1xf32> to vector<4x32xf32>
      %63 = arith.subf %55, %62 : vector<4x32xf32>
      %64 = arith.mulf %63, %63 : vector<4x32xf32>
      %cst_37 = arith.constant dense<0.000000e+00> : vector<4xf32>
      %65 = vector.multi_reduction <add>, %64, %cst_37 [1] : vector<4x32xf32> to vector<4xf32>
      %66 = vector.shape_cast %65 : vector<4xf32> to vector<4x1xf32>
      %cst_38 = arith.constant 3.200000e+01 : f32
      %67 = vector.broadcast %cst_38 : f32 to vector<4x1xf32>
      %68 = arith.divf %66, %67 : vector<4x1xf32>
      %69 = vector.broadcast %61 : vector<4x1xf32> to vector<4x32xf32>
      %70 = arith.subf %55, %69 : vector<4x32xf32>
      %cst_39 = arith.constant 9.99999974E-6 : f32
      %71 = vector.broadcast %cst_39 : f32 to vector<4x1xf32>
      %72 = arith.addf %68, %71 : vector<4x1xf32>
      %73 = math.rsqrt %72 : vector<4x1xf32>
      %74 = vector.broadcast %73 : vector<4x1xf32> to vector<4x32xf32>
      %75 = arith.mulf %70, %74 : vector<4x32xf32>
      %76 = vector.broadcast %56 : vector<1x32xf32> to vector<4x32xf32>
      %77 = arith.mulf %75, %76 : vector<4x32xf32>
      %78 = vector.broadcast %57 : vector<1x32xf32> to vector<4x32xf32>
      %79 = arith.addf %77, %78 : vector<4x32xf32>
      %80 = arith.truncf %79 : vector<4x32xf32> to vector<4x32xbf16>
      %c0_40 = arith.constant 0 : index
      %c0_41 = arith.constant 0 : index
      %81 = vector.load %arg9[%c0_40, %c0_41] : memref<4x32xbf16, #tpu.memory_space<vmem>>, vector<4x32xbf16>
      tpu.vector_store %arg9[%c0_40, %c0_41], %80 {strides = array<i32>} : memref<4x32xbf16, #tpu.memory_space<vmem>>, vector<4x32xbf16>,
    } else {
    }
    %c0 = arith.constant 0 : index
    %c0_1 = arith.constant 0 : index
    %3 = vector.load %arg9[%c0, %c0_1] : memref<4x32xbf16, #tpu.memory_space<vmem>>, vector<4x32xbf16>
    %c0_2 = arith.constant 0 : index
    %c0_3 = arith.constant 0 : index
    %4 = vector.load %arg6[%c0_2, %c0_3] : memref<64x32xbf16, #tpu.memory_space<vmem>>, vector<64x32xbf16>
    %cst = arith.constant dense<0.000000e+00> : vector<4x64xf32>
    %5 = tpu.matmul %3, %4, %cst {dimension_numbers = #tpu.dot_dimension_numbers<[1], [1], [0], [0], [0, 0, 1, 0], [], []>} : vector<4x32xbf16>, vector<64x32xbf16>, vector<4x64xf32> -> vector<4x64xf32>
    %c0_4 = arith.constant 0 : index
    %c0_5 = arith.constant 0 : index
    %6 = vector.load %arg7[%c0_4, %c0_5] : memref<4x64xf32, #tpu.memory_space<vmem>>, vector<4x64xf32>
    %7 = arith.addf %5, %6 : vector<4x64xf32>
    %c0_6 = arith.constant 0 : index
    %c0_7 = arith.constant 0 : index
    %8 = vector.load %arg8[%c0_6, %c0_7] : memref<4x64xf32, #tpu.memory_space<vmem>>, vector<4x64xf32>
    tpu.vector_store %arg8[%c0_6, %c0_7], %7 {strides = array<i32>} : memref<4x64xf32, #tpu.memory_space<vmem>>, vector<4x64xf32>,
    return
  }
  func.func @transform_0(%arg0: i32) -> (i32, i32) {
    %c0_i32 = arith.constant 0 : i32
    %c0_i32_0 = arith.constant 0 : i32
    %c0_i32_1 = arith.constant 0 : i32
    return %c0_i32, %c0_i32_0 : i32, i32
  }
  func.func @transform_1(%arg0: i32) -> (i32, i32) {
    %c0_i32 = arith.constant 0 : i32
    %c0_i32_0 = arith.constant 0 : i32
    %c0_i32_1 = arith.constant 0 : i32
    return %c0_i32, %c0_i32_0 : i32, i32
  }
  func.func @transform_2(%arg0: i32) -> (i32, i32) {
    %c0_i32 = arith.constant 0 : i32
    %c0_i32_0 = arith.constant 0 : i32
    %c0_i32_1 = arith.constant 0 : i32
    return %c0_i32, %c0_i32_0 : i32, i32
  }
  func.func @transform_3(%arg0: i32) -> (i32, i32) {
    %c0_i32 = arith.constant 0 : i32
    %c0_i32_0 = arith.constant 0 : i32
    %c0_i32_1 = arith.constant 0 : i32
    return %c0_i32, %c0_i32_0 : i32, i32
  }
  func.func @transform_4(%arg0: i32) -> (i32, i32) {
    %c0_i32 = arith.constant 0 : i32
    %c0_i32_0 = arith.constant 0 : i32
    %c0_i32_1 = arith.constant 0 : i32
    return %c0_i32, %c0_i32_0 : i32, i32
  }
  func.func @transform_5(%arg0: i32) -> (i32, i32) {
    %c0_i32 = arith.constant 0 : i32
    %c0_i32_0 = arith.constant 0 : i32
    return %arg0, %c0_i32 : i32, i32
  }
  func.func @transform_6(%arg0: i32) -> (i32, i32) {
    %c0_i32 = arith.constant 0 : i32
    %c0_i32_0 = arith.constant 0 : i32
    return %c0_i32, %arg0 : i32, i32
  }
  func.func @transform_7(%arg0: i32) -> (i32, i32) {
    %c0_i32 = arith.constant 0 : i32
    %c0_i32_0 = arith.constant 0 : i32
    return %c0_i32, %arg0 : i32, i32
  }
}

</mosaic_0001>

<llo_original>
// kernel: bert_unilm_forward.6
$region0: #{bert_unilm_forward.6}
  #allocation0 [shape = 'u32[]', space=smem, size = 0x4, offset = 0x4, fixed_abs, tag = 'smem constant byte address 0x4 - core index']
  #allocation1 [shape = 'u32[144,128]{1,0:T(1,128)}', space=vmem, size = 0x12000, scoped, tag = 'internal scratch']
  %s0 = inlined_call_operand.vmem [shape: bf16[16,32], index: 0, kind: input, shape index: {}]
  %s1 = inlined_call_operand.vmem [shape: bf16[32,64], index: 1, kind: input, shape index: {}]
  %s2 = inlined_call_operand.vmem [shape: f32[1,64], index: 2, kind: input, shape index: {}]
  %s3 = inlined_call_operand.vmem [shape: bf16[64,32], index: 3, kind: input, shape index: {}]
  %s4 = inlined_call_operand.vmem [shape: f32[1,32], index: 4, kind: input, shape index: {}]
  %s5 = inlined_call_operand.vmem [shape: f32[1,32], index: 5, kind: input, shape index: {}]
  %s6 = inlined_call_operand.vmem [shape: f32[1,32], index: 6, kind: input, shape index: {}]
  %s7 = inlined_call_operand.vmem [shape: bf16[16,32], index: 7, kind: output, shape index: {}]
  %s8 = sld [smem:[#allocation0]]
  $region38: #{bert_unilm_forward.6} parent=0
    _
  %s10 = ssub.s32 1, %s8
  %s11 = scalar_select 0, %s10, %s8
  // Predicated region
  $region2: #{bert_unilm_forward.6} parent=0 // pred_check
    _
  $region3: #{bert_unilm_forward.6} parent=0 // pred_check_branch
    %13 = sbr.rel (0) target = $region5
  $region4: #{bert_unilm_forward.6} parent=0 // pred_region
    _
  $region5: #{bert_unilm_forward.6} parent=0 // pred_fallthru
    _
  // Predicated region
  $region6: #{bert_unilm_forward.6} parent=0 // pred_check
    _
  $region7: #{bert_unilm_forward.6} parent=0 // pred_check_branch
    %15 = sbr.rel (0) target = $region9
  $region8: #{bert_unilm_forward.6} parent=0 // pred_region
    _
  $region9: #{bert_unilm_forward.6} parent=0 // pred_fallthru
    _
  // Predicated region
  $region10: #{bert_unilm_forward.6} parent=0 // pred_check
    _
  $region11: #{bert_unilm_forward.6} parent=0 // pred_check_branch
    %17 = sbr.rel (0) target = $region13
  $region12: #{bert_unilm_forward.6} parent=0 // pred_region
    _
  $region13: #{bert_unilm_forward.6} parent=0 // pred_fallthru
    _
  // Predicated region
  $region14: #{bert_unilm_forward.6} parent=0 // pred_check
    _
  $region15: #{bert_unilm_forward.6} parent=0 // pred_check_branch
    %19 = sbr.rel (0) target = $region17
  $region16: #{bert_unilm_forward.6} parent=0 // pred_region
    _
  $region17: #{bert_unilm_forward.6} parent=0 // pred_fallthru
    _
  // Predicated region
  $region18: #{bert_unilm_forward.6} parent=0 // pred_check
    _
  $region19: #{bert_unilm_forward.6} parent=0 // pred_check_branch
    %21 = sbr.rel (0) target = $region21
  $region20: #{bert_unilm_forward.6} parent=0 // pred_region
    _
  $region21: #{bert_unilm_forward.6} parent=0 // pred_fallthru
    _
  // Predicated region
  $region22: #{bert_unilm_forward.6} parent=0 // pred_check
    _
  $region23: #{bert_unilm_forward.6} parent=0 // pred_check_branch
    %23 = sbr.rel (0) target = $region25
  $region24: #{bert_unilm_forward.6} parent=0 // pred_region
    _
  $region25: #{bert_unilm_forward.6} parent=0 // pred_fallthru
    _
  // Predicated region
  $region26: #{bert_unilm_forward.6} parent=0 // pred_check
    _
  $region27: #{bert_unilm_forward.6} parent=0 // pred_check_branch
    %25 = sbr.rel (0) target = $region29
  $region28: #{bert_unilm_forward.6} parent=0 // pred_region
    _
  $region29: #{bert_unilm_forward.6} parent=0 // pred_fallthru
    _
  %v27 = vld [vmem:[%s0] sm:$0xf]
  %v28 = vld [vmem:[%s0 + $0x4] sm:$0xf]
  %v29 = vld [vmem:[%s1] sm:$0xf]
  %v30 = vld [vmem:[%s1 + $0x4] sm:$0xf]
  %v31 = vld [vmem:[%s1 + $0x8] sm:$0xf]
  %v32 = vld [vmem:[%s1 + $0xc] sm:$0xf]
  %v33 = vld [vmem:[%s2] sm:$0x1]
  %v35 = vlaneseq
  %v36 = vshrl.u32 %v35, 7
  %v37 = vsub.s32 0, %v36
  %v38 = vrot.slane %v33, %v37
  %v42 = vunpack.c.l.b16 %v27
  %v43 = vunpack.c.l.b16 %v28
  %v44 = vpack.c.b16 %v43, %v42
  %v49 = vunpack.c.l.b16 %v29
  %v50 = vunpack.c.l.b16 %v30
  %v51 = vunpack.c.l.b16 %v31
  %v52 = vunpack.c.l.b16 %v32
  %v53 = vpack.c.b16 %v50, %v49
  %v54 = vpack.c.b16 %v52, %v51
  %vm57 = vcmask 261120
  %v59 = vsel %vm57, %v44, 0
  %61 = vmatprep.subr.bf16.mxu0 0
  %62 = vmatpush1.bf16.msra.mxu0 %v53
  %63 = vmatprep.subr.bf16.mxu0 0
  %64 = vmatpush1.bf16.msra.mxu0 %v54
  %65 = vmatprep.subr.bf16.mxu0 0
  %66 = vmatpush1.bf16.msra.mxu0 0
  %67 = vmatprep.subr.bf16.mxu0 0
  %68 = vmatpush1.bf16.msra.mxu0 0
  %69 = vmatprep.subr.bf16.mxu0 0
  %70 = vmatpush1.bf16.msra.mxu0 0
  %71 = vmatprep.subr.bf16.mxu0 0
  %72 = vmatpush1.bf16.msra.mxu0 0
  %73 = vmatprep.subr.bf16.mxu0 0
  %74 = vmatpush1.bf16.msra.mxu0 0
  %75 = vmatprep.subr.bf16.mxu0 0
  %76 = vmatpush1.bf16.msra.mxu0 0
  %77 = vmatprep.subr.bf16.mxu0 0
  %78 = vmatpush1.bf16.msra.mxu0 0
  %79 = vmatprep.subr.bf16.mxu0 0
  %80 = vmatpush1.bf16.msra.mxu0 0
  %81 = vmatprep.subr.bf16.mxu0 0
  %82 = vmatpush1.bf16.msra.mxu0 0
  %83 = vmatprep.subr.bf16.mxu0 0
  %84 = vmatpush1.bf16.msra.mxu0 0
  %85 = vmatprep.subr.bf16.mxu0 0
  %86 = vmatpush1.bf16.msra.mxu0 0
  %87 = vmatprep.subr.bf16.mxu0 0
  %88 = vmatpush1.bf16.msra.mxu0 0
  %89 = vmatprep.subr.bf16.mxu0 0
  %90 = vmatpush1.bf16.msra.mxu0 0
  %91 = vmatprep.subr.bf16.mxu0 0
  %92 = vmatpush1.bf16.msra.mxu0 0
  %93 = vmatprep.mubr.bf16.mxu0 0
  %94 = vmatmul.mubr.bf16.gmra.mrb[0].mxu0 %v59
  %v95 = vpop.f32.mrb[0].mxu0
  %v96 = vadd.f32 %v38, %v95
  %v97 = vpop.f32.mrb[0].mxu0
  %v98 = vpop.f32.mrb[0].mxu0
  %v99 = vadd.f32 %v38, %v98
  %v100 = vpop.f32.mrb[0].mxu0
  %101 = vdwg.mxu0
  %v102 = vmul.f32 %v96, 0.5
  %v103 = vmul.f32 %v99, 0.5
  %v104 = vmul.f32 %v96, 0.70710677
  %v105 = vmul.f32 %v99, 0.70710677
  %vm106 = vcmp.lt.f32.partialorder %v104, 0.0
  %vm107 = vcmp.lt.f32.partialorder %v105, 0.0
  %v108 = vsel %vm106, -1.0, 1.0
  %v109 = vsel %vm107, -1.0, 1.0
  %v110 = vand.u32 2147483647, %v104
  %v111 = vand.u32 2147483647, %v105
  %v112 = vmul.f32 %v110, 0.3275911
  %v113 = vmul.f32 %v111, 0.3275911
  %v114 = vadd.f32 %v112, 1.0
  %v115 = vadd.f32 %v113, 1.0
  %v116 = vrcp.pop %v114
  %v117 = vmul.f32 1.0, %v116
  %v118 = vrcp.pop %v115
  %v119 = vmul.f32 1.0, %v118
  %v120 = vmul.f32 %v117, 1.0614054
  %v121 = vmul.f32 %v119, 1.0614054
  %v122 = vadd.f32 %v120, -1.4531521
  %v123 = vadd.f32 %v121, -1.4531521
  %v124 = vmul.f32 %v122, %v117
  %v125 = vmul.f32 %v123, %v119
  %v126 = vadd.f32 %v124, 1.4214138
  %v127 = vadd.f32 %v125, 1.4214138
  %v128 = vmul.f32 %v126, %v117
  %v129 = vmul.f32 %v127, %v119
  %v130 = vadd.f32 %v128, -0.28449672
  %v131 = vadd.f32 %v129, -0.28449672
  %v132 = vmul.f32 %v130, %v117
  %v133 = vmul.f32 %v131, %v119
  %v134 = vadd.f32 %v132, 0.2548296
  %v135 = vadd.f32 %v133, 0.2548296
  %v136 = vmul.f32 %v134, %v117
  %v137 = vmul.f32 %v135, %v119
  %v138 = vsub.f32 0.0, %v110
  %v139 = vsub.f32 0.0, %v111
  %v140 = vmul.f32 %v138, %v110
  %v141 = vmul.f32 %v139, %v111
  %v142 = vmul.f32 %v140, 1.442695
  %v143 = vpow.pop %v142
  %v144 = vmul.f32 %v141, 1.442695
  %v145 = vpow.pop %v144
  %v146 = vmul.f32 %v136, %v143
  %v147 = vmul.f32 %v137, %v145
  %v148 = vsub.f32 1.0, %v146
  %v149 = vsub.f32 1.0, %v147
  %v150 = vmul.f32 %v108, %v148
  %v151 = vmul.f32 %v109, %v149
  %v152 = vadd.f32 %v150, 1.0
  %v153 = vadd.f32 %v151, 1.0
  %v154 = vmul.f32 %v102, %v152
  %v155 = vmul.f32 %v103, %v153
  %v156 = vpack.c.bf16 %v155, %v154
  %v157 = vld [vmem:[%s3] sm:$0xf]
  %v158 = vld [vmem:[%s3 + $0x4] sm:$0xf]
  %v159 = vld [vmem:[%s3 + $0x8] sm:$0xf]
  %v160 = vld [vmem:[%s3 + $0xc] sm:$0xf]
  %v161 = vld [vmem:[%s3 + $0x10] sm:$0xf]
  %v162 = vld [vmem:[%s3 + $0x14] sm:$0xf]
  %v163 = vld [vmem:[%s3 + $0x18] sm:$0xf]
  %v164 = vld [vmem:[%s3 + $0x1c] sm:$0xf]
  %v165 = vld [vmem:[%s4] sm:$0x1]
  %v167 = vlaneseq
  %v168 = vshrl.u32 %v167, 7
  %v169 = vsub.s32 0, %v168
  %v170 = vrot.slane %v165, %v169
  %v180 = vunpack.c.l.b16 %v157
  %v181 = vunpack.c.l.b16 %v158
  %v182 = vunpack.c.l.b16 %v159
  %v183 = vunpack.c.l.b16 %v160
  %v184 = vunpack.c.l.b16 %v161
  %v185 = vunpack.c.l.b16 %v162
  %v186 = vunpack.c.l.b16 %v163
  %v187 = vunpack.c.l.b16 %v164
  %v188 = vpack.c.b16 %v181, %v180
  %v189 = vpack.c.b16 %v183, %v182
  %v190 = vpack.c.b16 %v185, %v184
  %v191 = vpack.c.b16 %v187, %v186
  %vm196 = vcmask 523264
  %v198 = vsel %vm196, %v156, 0
  %200 = vmatprep.subr.bf16.mxu0 0
  %201 = vmatpush1.bf16.msra.mxu0 %v188
  %202 = vmatprep.subr.bf16.mxu0 0
  %203 = vmatpush1.bf16.msra.mxu0 %v189
  %204 = vmatprep.subr.bf16.mxu0 0
  %205 = vmatpush1.bf16.msra.mxu0 %v190
  %206 = vmatprep.subr.bf16.mxu0 0
  %207 = vmatpush1.bf16.msra.mxu0 %v191
  %208 = vmatprep.subr.bf16.mxu0 0
  %209 = vmatpush1.bf16.msra.mxu0 0
  %210 = vmatprep.subr.bf16.mxu0 0
  %211 = vmatpush1.bf16.msra.mxu0 0
  %212 = vmatprep.subr.bf16.mxu0 0
  %213 = vmatpush1.bf16.msra.mxu0 0
  %214 = vmatprep.subr.bf16.mxu0 0
  %215 = vmatpush1.bf16.msra.mxu0 0
  %216 = vmatprep.subr.bf16.mxu0 0
  %217 = vmatpush1.bf16.msra.mxu0 0
  %218 = vmatprep.subr.bf16.mxu0 0
  %219 = vmatpush1.bf16.msra.mxu0 0
  %220 = vmatprep.subr.bf16.mxu0 0
  %221 = vmatpush1.bf16.msra.mxu0 0
  %222 = vmatprep.subr.bf16.mxu0 0
  %223 = vmatpush1.bf16.msra.mxu0 0
  %224 = vmatprep.subr.bf16.mxu0 0
  %225 = vmatpush1.bf16.msra.mxu0 0
  %226 = vmatprep.subr.bf16.mxu0 0
  %227 = vmatpush1.bf16.msra.mxu0 0
  %228 = vmatprep.subr.bf16.mxu0 0
  %229 = vmatpush1.bf16.msra.mxu0 0
  %230 = vmatprep.subr.bf16.mxu0 0
  %231 = vmatpush1.bf16.msra.mxu0 0
  %232 = vmatprep.mubr.bf16.mxu0 0
  %233 = vmatmul.mubr.bf16.gmra.mrb[0].mxu0 %v198
  %v234 = vpop.f32.mrb[0].mxu0
  %v235 = vadd.f32 %v170, %v234
  %v236 = vpop.f32.mrb[0].mxu0
  %v237 = vpop.f32.mrb[0].mxu0
  %v238 = vadd.f32 %v170, %v237
  %v239 = vpop.f32.mrb[0].mxu0
  %240 = vdwg.mxu0
  %v241 = vunpack.c.l.bf16 %v27
  %v242 = vunpack.c.l.bf16 %v28
  %v243 = vadd.f32 %v235, %v241
  %v244 = vadd.f32 %v238, %v242
  %v245 = vld [vmem:[%s5] sm:$0x1]
  %v246 = vld [vmem:[%s6] sm:$0x1]
  %v247 = vsel %vm57, %v243, 0.0
  %248 = vadd.xlane.f32.xlu0 %v247
  %v249 = vpop.xlane.xlu0 %248
  %v250 = vsel %vm57, %v244, 0.0
  %251 = vadd.xlane.f32.xlu0 %v250
  %v252 = vpop.xlane.xlu0 %251
  %v253 = vrcp.pop 32.0
  %v254 = vmul.f32 %v249, %v253
  %v255 = vmul.f32 %v252, %v253
  %v256 = vsub.f32 %v243, %v254
  %v257 = vsub.f32 %v244, %v255
  %v258 = vmul.f32 %v256, %v256
  %v259 = vmul.f32 %v257, %v257
  %v260 = vsel %vm57, %v258, 0.0
  %261 = vadd.xlane.f32.xlu0 %v260
  %v262 = vpop.xlane.xlu0 %261
  %v263 = vsel %vm57, %v259, 0.0
  %264 = vadd.xlane.f32.xlu0 %v263
  %v265 = vpop.xlane.xlu0 %264
  %v266 = vmul.f32 %v262, %v253
  %v267 = vmul.f32 %v265, %v253
  %v268 = vadd.f32 %v266, 1e-05
  %v269 = vadd.f32 %v267, 1e-05
  %v270 = vrsqrt.pop %v268
  %v271 = vrsqrt.pop %v269
  %v272 = vmul.f32 %v256, %v270
  %v273 = vmul.f32 %v257, %v271
  %v275 = vlaneseq
  %v276 = vshrl.u32 %v275, 7
  %v277 = vsub.s32 0, %v276
  %v278 = vrot.slane %v245, %v277
  %v280 = vmul.f32 %v272, %v278
  %v281 = vmul.f32 %v273, %v278
  %v283 = vlaneseq
  %v284 = vshrl.u32 %v283, 7
  %v285 = vsub.s32 0, %v284
  %v286 = vrot.slane %v246, %v285
  %v288 = vadd.f32 %v280, %v286
  %v289 = vadd.f32 %v281, %v286
  %v290 = vpack.c.bf16 %v289, %v288
  %v292 = vunpack.c.l.b16 %v290
  %v293 = vunpack.c.h.b16 %v290
  %v294 = vpack.c.b16 %v292, %v292
  %v295 = vpack.c.b16 %v293, %v293
  %vm298 = vcmask 257024
  %299 = vst.msk [vmem:[%s7] sm:$0xf] %vm298, %v294
  %300 = vst.msk [vmem:[%s7 + $0x4] sm:$0xf] %vm298, %v295
  // Predicated region
  $region30: #{bert_unilm_forward.6} parent=0 // pred_check
    _
  $region31: #{bert_unilm_forward.6} parent=0 // pred_check_branch
    %302 = sbr.rel (0) target = $region33
  $region32: #{bert_unilm_forward.6} parent=0 // pred_region
    _
  $region33: #{bert_unilm_forward.6} parent=0 // pred_fallthru
    _
  // Predicated region
  $region34: #{bert_unilm_forward.6} parent=0 // pred_check
    _
  $region35: #{bert_unilm_forward.6} parent=0 // pred_check_branch
    %304 = sbr.rel (0) target = $region37
  $region36: #{bert_unilm_forward.6} parent=0 // pred_region
    _
  $region37: #{bert_unilm_forward.6} parent=0 // pred_fallthru
    _

// kernel: bert_unilm_forward.9
$region0: #{bert_unilm_forward.9}
  #allocation0 [shape = 'u32[]', space=smem, size = 0x4, offset = 0x4, fixed_abs, tag = 'smem constant byte address 0x4 - core index']
  #allocation1 [shape = 'u32[144,128]{1,0:T(1,128)}', space=vmem, size = 0x12000, scoped, tag = 'internal scratch']
  #allocation2 [shape = 'bf16[4,32]{1,0:T(4,128)(2,1)}', space=vmem, size = 0x400, scoped, tag = 'scratch operand']
  %s0 = inlined_call_operand.vmem [shape: bf16[4,32], index: 0, kind: input, shape index: {}]
  %s1 = inlined_call_operand.vmem [shape: bf16[32,32], index: 1, kind: input, shape index: {}]
  %s2 = inlined_call_operand.vmem [shape: f32[1,32], index: 2, kind: input, shape index: {}]
  %s3 = inlined_call_operand.vmem [shape: f32[1,32], index: 3, kind: input, shape index: {}]
  %s4 = inlined_call_operand.vmem [shape: f32[1,32], index: 4, kind: input, shape index: {}]
  %s5 = inlined_call_operand.vmem [shape: bf16[64,32], index: 5, kind: input, shape index: {}]
  %s6 = inlined_call_operand.vmem [shape: f32[4,64], index: 6, kind: input, shape index: {}]
  %s7 = inlined_call_operand.hbm [shape: f32[4,64], index: 7, kind: output, shape index: {}]
  %s8 = sld [smem:[#allocation0]]
  $region42: #{bert_unilm_forward.9} parent=0
    _
  %s10 = ssub.s32 1, %s8
  %s11 = scalar_select 0, %s10, %s8
  $region1: #{bert_unilm_forward.9} parent=0
    #allocation3 [shape = 'u8[2048]{0}', space=vmem, size = 0x800, scoped, tag = 'output window, operand 0, single buffered']
    #allocation4 [shape = 's32[1]{0}', space=sflag, size = 0x4, scoped, tag = 'scoped memory for bert_unilm_forward.9']
    %12 = vsyncpa [#allocation4], 0
    // Predicated region
    $region2: #{bert_unilm_forward.9} parent=1 // pred_check
      _
    $region3: #{bert_unilm_forward.9} parent=1 // pred_check_branch
      %14 = sbr.rel (0) target = $region5
    $region4: #{bert_unilm_forward.9} parent=1 // pred_region
      _
    $region5: #{bert_unilm_forward.9} parent=1 // pred_fallthru
      _
    // Predicated region
    $region6: #{bert_unilm_forward.9} parent=1 // pred_check
      _
    $region7: #{bert_unilm_forward.9} parent=1 // pred_check_branch
      %16 = sbr.rel (0) target = $region9
    $region8: #{bert_unilm_forward.9} parent=1 // pred_region
      _
    $region9: #{bert_unilm_forward.9} parent=1 // pred_fallthru
      _
    // Predicated region
    $region10: #{bert_unilm_forward.9} parent=1 // pred_check
      _
    $region11: #{bert_unilm_forward.9} parent=1 // pred_check_branch
      %18 = sbr.rel (0) target = $region13
    $region12: #{bert_unilm_forward.9} parent=1 // pred_region
      _
    $region13: #{bert_unilm_forward.9} parent=1 // pred_fallthru
      _
    // Predicated region
    $region14: #{bert_unilm_forward.9} parent=1 // pred_check
      _
    $region15: #{bert_unilm_forward.9} parent=1 // pred_check_branch
      %20 = sbr.rel (0) target = $region17
    $region16: #{bert_unilm_forward.9} parent=1 // pred_region
      _
    $region17: #{bert_unilm_forward.9} parent=1 // pred_fallthru
      _
    // Predicated region
    $region18: #{bert_unilm_forward.9} parent=1 // pred_check
      _
    $region19: #{bert_unilm_forward.9} parent=1 // pred_check_branch
      %22 = sbr.rel (0) target = $region21
    $region20: #{bert_unilm_forward.9} parent=1 // pred_region
      _
    $region21: #{bert_unilm_forward.9} parent=1 // pred_fallthru
      _
    // Predicated region
    $region22: #{bert_unilm_forward.9} parent=1 // pred_check
      _
    $region23: #{bert_unilm_forward.9} parent=1 // pred_check_branch
      %24 = sbr.rel (0) target = $region25
    $region24: #{bert_unilm_forward.9} parent=1 // pred_region
      _
    $region25: #{bert_unilm_forward.9} parent=1 // pred_fallthru
      _
    // Predicated region
    $region26: #{bert_unilm_forward.9} parent=1 // pred_check
      _
    $region27: #{bert_unilm_forward.9} parent=1 // pred_check_branch
      %26 = sbr.rel (0) target = $region29
    $region28: #{bert_unilm_forward.9} parent=1 // pred_region
      _
    $region29: #{bert_unilm_forward.9} parent=1 // pred_fallthru
      _
    %p28 = scmp.eq.s32.totalorder 0, 0
    // Predicated region
    $region30: #{bert_unilm_forward.9} parent=1 // pred_check
      %p29 = pneg %p28
    $region31: #{bert_unilm_forward.9} parent=1 // pred_check_branch
      %31 = sbr.rel (%p29) target = $region33
    $region32: #{bert_unilm_forward.9} parent=1 // pred_region
      %v32 = vld [vmem:[%s0] sm:$0x3]
      %v33 = vld [vmem:[%s1] sm:$0xf]
      %v34 = vld [vmem:[%s1 + $0x4] sm:$0xf]
      %v35 = vld [vmem:[%s1 + $0x8] sm:$0xf]
      %v36 = vld [vmem:[%s1 + $0xc] sm:$0xf]
      %v37 = vld [vmem:[%s2] sm:$0x1]
      %v39 = vlaneseq
      %v40 = vshrl.u32 %v39, 7
      %v41 = vsub.s32 0, %v40
      %v42 = vrot.slane %v37, %v41
      %v48 = vunpack.c.l.b16 %v33
      %v49 = vunpack.c.l.b16 %v34
      %v50 = vunpack.c.l.b16 %v35
      %v51 = vunpack.c.l.b16 %v36
      %v52 = vpack.c.b16 %v49, %v48
      %v53 = vpack.c.b16 %v51, %v50
      %vm56 = vcmask 261120
      %v58 = vsel %vm56, %v32, 0
      %60 = vmatprep.subr.bf16.mxu0 0
      %61 = vmatpush1.bf16.msra.mxu0 %v52
      %62 = vmatprep.subr.bf16.mxu0 0
      %63 = vmatpush1.bf16.msra.mxu0 %v53
      %64 = vmatprep.subr.bf16.mxu0 0
      %65 = vmatpush1.bf16.msra.mxu0 0
      %66 = vmatprep.subr.bf16.mxu0 0
      %67 = vmatpush1.bf16.msra.mxu0 0
      %68 = vmatprep.subr.bf16.mxu0 0
      %69 = vmatpush1.bf16.msra.mxu0 0
      %70 = vmatprep.subr.bf16.mxu0 0
      %71 = vmatpush1.bf16.msra.mxu0 0
      %72 = vmatprep.subr.bf16.mxu0 0
      %73 = vmatpush1.bf16.msra.mxu0 0
      %74 = vmatprep.subr.bf16.mxu0 0
      %75 = vmatpush1.bf16.msra.mxu0 0
      %76 = vmatprep.subr.bf16.mxu0 0
      %77 = vmatpush1.bf16.msra.mxu0 0
      %78 = vmatprep.subr.bf16.mxu0 0
      %79 = vmatpush1.bf16.msra.mxu0 0
      %80 = vmatprep.subr.bf16.mxu0 0
      %81 = vmatpush1.bf16.msra.mxu0 0
      %82 = vmatprep.subr.bf16.mxu0 0
      %83 = vmatpush1.bf16.msra.mxu0 0
      %84 = vmatprep.subr.bf16.mxu0 0
      %85 = vmatpush1.bf16.msra.mxu0 0
      %86 = vmatprep.subr.bf16.mxu0 0
      %87 = vmatpush1.bf16.msra.mxu0 0
      %88 = vmatprep.subr.bf16.mxu0 0
      %89 = vmatpush1.bf16.msra.mxu0 0
      %90 = vmatprep.subr.bf16.mxu0 0
      %91 = vmatpush1.bf16.msra.mxu0 0
      %92 = vmatprep.mubr.bf16.mxu0 0
      %93 = vmatmul.mubr.bf16.gmra.mrb[0].mxu0 %v58
      %v94 = vpop.f32.mrb[0].mxu0
      %v95 = vadd.f32 %v42, %v94
      %v96 = vpop.f32.mrb[0].mxu0
      %v97 = vpop.f32.mrb[0].mxu0
      %v98 = vpop.f32.mrb[0].mxu0
      %99 = vdwg.mxu0
      %v100 = vmul.f32 %v95, 0.5
      %v101 = vmul.f32 %v95, 0.70710677
      %vm102 = vcmp.lt.f32.partialorder %v101, 0.0
      %v103 = vsel %vm102, -1.0, 1.0
      %v104 = vand.u32 2147483647, %v101
      %v105 = vmul.f32 %v104, 0.3275911
      %v106 = vadd.f32 %v105, 1.0
      %v107 = vrcp.pop %v106
      %v108 = vmul.f32 1.0, %v107
      %v109 = vmul.f32 %v108, 1.0614054
      %v110 = vadd.f32 %v109, -1.4531521
      %v111 = vmul.f32 %v110, %v108
      %v112 = vadd.f32 %v111, 1.4214138
      %v113 = vmul.f32 %v112, %v108
      %v114 = vadd.f32 %v113, -0.28449672
      %v115 = vmul.f32 %v114, %v108
      %v116 = vadd.f32 %v115, 0.2548296
      %v117 = vmul.f32 %v116, %v108
      %v118 = vsub.f32 0.0, %v104
      %v119 = vmul.f32 %v118, %v104
      %v120 = vmul.f32 %v119, 1.442695
      %v121 = vpow.pop %v120
      %v122 = vmul.f32 %v117, %v121
      %v123 = vsub.f32 1.0, %v122
      %v124 = vmul.f32 %v103, %v123
      %v125 = vadd.f32 %v124, 1.0
      %v126 = vmul.f32 %v100, %v125
      %v127 = vld [vmem:[%s3] sm:$0x1]
      %v128 = vld [vmem:[%s4] sm:$0x1]
      %vm129 = vcmask 257024
      %v130 = vsel %vm129, %v126, 0.0
      %131 = vadd.xlane.f32.xlu0 %v130
      %v132 = vpop.xlane.xlu0 %131
      %v133 = vrcp.pop 32.0
      %v134 = vmul.f32 %v132, %v133
      %v135 = vsub.f32 %v126, %v134
      %v136 = vmul.f32 %v135, %v135
      %v137 = vsel %vm129, %v136, 0.0
      %138 = vadd.xlane.f32.xlu0 %v137
      %v139 = vpop.xlane.xlu0 %138
      %v140 = vmul.f32 %v139, %v133
      %v141 = vadd.f32 %v140, 1e-05
      %v142 = vrsqrt.pop %v141
      %v143 = vmul.f32 %v135, %v142
      %v145 = vlaneseq
      %v146 = vshrl.u32 %v145, 7
      %v147 = vsub.s32 0, %v146
      %v148 = vrot.slane %v127, %v147
      %v150 = vmul.f32 %v143, %v148
      %v152 = vlaneseq
      %v153 = vshrl.u32 %v152, 7
      %v154 = vsub.s32 0, %v153
      %v155 = vrot.slane %v128, %v154
      %v157 = vadd.f32 %v150, %v155
      %v158 = vpack.c.bf16 %v157, %v157
      %vm159 = vcmask 254976
      %160 = vst.msk [vmem:[#allocation2] sm:$0x3] %vm159, %v158
    $region33: #{bert_unilm_forward.9} parent=1 // pred_fallthru
      _
    %v161 = vld [vmem:[#allocation2] sm:$0x3]
    %v162 = vld [vmem:[%s5] sm:$0xf]
    %v163 = vld [vmem:[%s5 + $0x4] sm:$0xf]
    %v164 = vld [vmem:[%s5 + $0x8] sm:$0xf]
    %v165 = vld [vmem:[%s5 + $0xc] sm:$0xf]
    %v166 = vld [vmem:[%s5 + $0x10] sm:$0xf]
    %v167 = vld [vmem:[%s5 + $0x14] sm:$0xf]
    %v168 = vld [vmem:[%s5 + $0x18] sm:$0xf]
    %v169 = vld [vmem:[%s5 + $0x1c] sm:$0xf]
    %v170 = vld [vmem:[%s6] sm:$0xf]
    %v179 = vunpack.c.l.b16 %v162
    %v180 = vunpack.c.l.b16 %v163
    %v181 = vunpack.c.l.b16 %v164
    %v182 = vunpack.c.l.b16 %v165
    %v183 = vunpack.c.l.b16 %v166
    %v184 = vunpack.c.l.b16 %v167
    %v185 = vunpack.c.l.b16 %v168
    %v186 = vunpack.c.l.b16 %v169
    %v187 = vpack.c.b16 %v180, %v179
    %v188 = vpack.c.b16 %v182, %v181
    %v189 = vpack.c.b16 %v184, %v183
    %v190 = vpack.c.b16 %v186, %v185
    %vm191 = vcmask 261120
    %v193 = vsel %vm191, %v161, 0
    %v196 = vsel %vm191, %v187, 0
    %v199 = vsel %vm191, %v188, 0
    %v202 = vsel %vm191, %v189, 0
    %v205 = vsel %vm191, %v190, 0
    %207 = vmatprep.subr.bf16.mxu0 0
    %208 = vmatpush1.bf16.xpose.msra.mxu0 %v196
    %209 = vmatprep.subr.bf16.mxu0 0
    %210 = vmatpush1.bf16.xpose.msra.mxu0 %v199
    %211 = vmatprep.subr.bf16.mxu0 0
    %212 = vmatpush1.bf16.xpose.msra.mxu0 %v202
    %213 = vmatprep.subr.bf16.mxu0 0
    %214 = vmatpush1.bf16.xpose.msra.mxu0 %v205
    %215 = vmatprep.subr.bf16.mxu0 0
    %216 = vmatpush1.bf16.xpose.msra.mxu0 0
    %217 = vmatprep.subr.bf16.mxu0 0
    %218 = vmatpush1.bf16.xpose.msra.mxu0 0
    %219 = vmatprep.subr.bf16.mxu0 0
    %220 = vmatpush1.bf16.xpose.msra.mxu0 0
    %221 = vmatprep.subr.bf16.mxu0 0
    %222 = vmatpush1.bf16.xpose.msra.mxu0 0
    %223 = vmatprep.subr.bf16.mxu0 0
    %224 = vmatpush1.bf16.xpose.msra.mxu0 0
    %225 = vmatprep.subr.bf16.mxu0 0
    %226 = vmatpush1.bf16.xpose.msra.mxu0 0
    %227 = vmatprep.subr.bf16.mxu0 0
    %228 = vmatpush1.bf16.xpose.msra.mxu0 0
    %229 = vmatprep.subr.bf16.mxu0 0
    %230 = vmatpush1.bf16.xpose.msra.mxu0 0
    %231 = vmatprep.subr.bf16.mxu0 0
    %232 = vmatpush1.bf16.xpose.msra.mxu0 0
    %233 = vmatprep.subr.bf16.mxu0 0
    %234 = vmatpush1.bf16.xpose.msra.mxu0 0
    %235 = vmatprep.subr.bf16.mxu0 0
    %236 = vmatpush1.bf16.xpose.msra.mxu0 0
    %237 = vmatprep.subr.bf16.mxu0 0
    %238 = vmatpush1.bf16.xpose.msra.mxu0 0
    %239 = vmatprep.mubr.bf16.mxu0 0
    %240 = vmatmul.mubr.bf16.gmra.mrb[0].mxu0 %v193
    %v241 = vpop.f32.mrb[0].mxu0
    %v242 = vadd.f32 %v170, %v241
    %v243 = vpop.f32.mrb[0].mxu0
    %v244 = vpop.f32.mrb[0].mxu0
    %v245 = vpop.f32.mrb[0].mxu0
    %246 = vdwg.mxu0
    %vm247 = vcmask 519168
    %248 = vst.msk [vmem:[#allocation3] sm:$0xf] %vm247, %v242
    // Predicated region
    $region34: #{bert_unilm_forward.9} parent=1 // pred_check
      _
    $region35: #{bert_unilm_forward.9} parent=1 // pred_check_branch
      %250 = sbr.rel (0) target = $region37
    $region36: #{bert_unilm_forward.9} parent=1 // pred_region
      %s252 = ssub.s32 64, 64
      %253 = vsyncadd [#allocation4], %s252
      %s255 = sshll.u32 [#allocation3], 4
      %s256 = int_to_ptr.vmem [resolvable:$true] %s255
      %258 = dma.vmem_to_hbm [thread:$0]  %s256, 64, %s7, [#allocation4]
    $region37: #{bert_unilm_forward.9} parent=1 // pred_fallthru
      _
    // Predicated region
    $region38: #{bert_unilm_forward.9} parent=1 // pred_check
      _
    $region39: #{bert_unilm_forward.9} parent=1 // pred_check_branch
      %260 = sbr.rel (0) target = $region41
    $region40: #{bert_unilm_forward.9} parent=1 // pred_region
      %261 = dma.done [#allocation4], 64
    $region41: #{bert_unilm_forward.9} parent=1 // pred_fallthru
      _
    %262 = vsyncpa [#allocation4], 1

// kernel: bert_unilm_forward.5
$region0: #{bert_unilm_forward.5}
  #allocation0 [shape = 'u32[]', space=smem, size = 0x4, offset = 0x4, fixed_abs, tag = 'smem constant byte address 0x4 - core index']
  #allocation1 [shape = 'u32[144,128]{1,0:T(1,128)}', space=vmem, size = 0x12000, scoped, tag = 'internal scratch']
  #allocation2 [shape = 'f32[8,96]{1,0:T(8,128)}', space=vmem, size = 0x1000, scoped, tag = 'scratch operand']
  #allocation3 [shape = 'f32[8,32]{1,0:T(8,128)}', space=vmem, size = 0x1000, scoped, tag = 'scratch operand']
  %s0 = inlined_call_operand.vmem [shape: bf16[2,8,32], index: 0, kind: input, shape index: {}]
  %s1 = inlined_call_operand.vmem [shape: f32[2,1,8], index: 1, kind: input, shape index: {}]
  %s2 = inlined_call_operand.vmem [shape: f32[2,1,8], index: 2, kind: input, shape index: {}]
  %s3 = inlined_call_operand.vmem [shape: bf16[32,96], index: 3, kind: input, shape index: {}]
  %s4 = inlined_call_operand.vmem [shape: f32[1,96], index: 4, kind: input, shape index: {}]
  %s5 = inlined_call_operand.vmem [shape: bf16[4,8,32], index: 5, kind: input, shape index: {}]
  %s6 = inlined_call_operand.vmem [shape: f32[1,32], index: 6, kind: input, shape index: {}]
  %s7 = inlined_call_operand.vmem [shape: f32[1,32], index: 7, kind: input, shape index: {}]
  %s8 = inlined_call_operand.vmem [shape: f32[1,32], index: 8, kind: input, shape index: {}]
  %s9 = inlined_call_operand.vmem [shape: bf16[2,8,32], index: 9, kind: output, shape index: {}]
  %s10 = sld [smem:[#allocation0]]
  $region69: #{bert_unilm_forward.5} parent=0
    _
  %s12 = ssub.s32 1, %s10
  %s13 = scalar_select 0, %s12, %s10
  loop: start=0, step=1, limit=4
  $region2: #{bert_unilm_forward.5} parent=0 // loop_pre_header
    _
  $region3: #{bert_unilm_forward.5} parent=0 // loop_header
    %s15 = sphi 0, %s19
    %p16 = scmp.ge.s32.totalorder %s15, 4
    %s25 = sphi 0, %s27
    %s28 = sphi 0, %s25
    %s29 = sphi 0, %s28
    %s45 = sphi 0, %s29
    %s51 = sphi 0, %s53
    %s54 = sphi 0, %s51
    %s55 = sphi 0, %s54
    %s71 = sphi 0, %s55
    %s77 = sphi 0, %s79
    %s80 = sphi 0, %s77
    %s81 = sphi 0, %s80
    %s97 = sphi 0, %s81
    %s101 = sphi 0, %s101
    %s103 = sphi 0, %s101
    %s104 = sphi 0, %s103
    %s118 = sphi 0, %s104
    %s122 = sphi 0, %s122
    %s124 = sphi 0, %s122
    %s125 = sphi 0, %s124
    %s139 = sphi 0, %s125
    %s143 = sphi 0, %s143
    %s145 = sphi 0, %s143
    %s146 = sphi 0, %s145
    %s160 = sphi 0, %s146
    %s164 = sphi 0, %s164
    %s166 = sphi 0, %s164
    %s167 = sphi 0, %s166
    %s181 = sphi 0, %s167
    %s185 = sphi 0, %s185
    %s187 = sphi 0, %s185
    %s188 = sphi 0, %s187
    %s202 = sphi 0, %s188
    %s206 = sphi 0, %s206
    %s208 = sphi 0, %s206
    %s209 = sphi 0, %s208
    %s223 = sphi 0, %s209
    %s229 = sphi 0, %s231
    %s232 = sphi 0, %s229
    %s233 = sphi 0, %s232
    %s249 = sphi 0, %s233
  $region4: #{bert_unilm_forward.5} parent=0 // loop_header_branch
    %18 = sbr.rel (%p16) target = $region8
  $region5: #{bert_unilm_forward.5} parent=0 // loop_body
    %s20 = ssub.s32 %s15, 1
    %s21 = ssub.s32 %s15, 2
    %s22 = sadd.s32 %s15, 1
    %s23 = ssub.s32 %s15, %s22
    %p24 = scmp.eq.s32.totalorder %s23, 0
    %s26 = sadd.s32 %s25, 1
    %s27 = scalar_select %p24, %s25, %s26
    %p30 = pneg %p24
    %p31 = scmp.eq.s32.totalorder %s15, 1
    %p32 = por %p30, %p31
    %p33 = scmp.ne.s32.totalorder %s25, %s28
    %p34 = scmp.eq.s32.totalorder %s15, 0
    %p35 = por %p33, %p34
    %p36 = scmp.ne.s32.totalorder %s25, %s28
    %p37 = scmp.eq.s32.totalorder %s20, 1
    %p38 = por %p36, %p37
    %p39 = scmp.ne.s32.totalorder %s28, %s29
    %p40 = scmp.eq.s32.totalorder %s20, 0
    %p41 = por %p39, %p40
    %p42 = scmp.ne.s32.totalorder %s28, %s29
    %p43 = scmp.eq.s32.totalorder %s21, 1
    %p44 = por %p42, %p43
    %p46 = scmp.ne.s32.totalorder %s29, %s45
    %p47 = scmp.eq.s32.totalorder %s21, 0
    %p48 = por %p46, %p47
    %s49 = ssub.s32 %s15, %s22
    %p50 = scmp.eq.s32.totalorder %s49, 0
    %s52 = sadd.s32 %s51, 1
    %s53 = scalar_select %p50, %s51, %s52
    %p56 = pneg %p50
    %p57 = scmp.eq.s32.totalorder %s15, 1
    %p58 = por %p56, %p57
    %p59 = scmp.ne.s32.totalorder %s51, %s54
    %p60 = scmp.eq.s32.totalorder %s15, 0
    %p61 = por %p59, %p60
    %p62 = scmp.ne.s32.totalorder %s51, %s54
    %p63 = scmp.eq.s32.totalorder %s20, 1
    %p64 = por %p62, %p63
    %p65 = scmp.ne.s32.totalorder %s54, %s55
    %p66 = scmp.eq.s32.totalorder %s20, 0
    %p67 = por %p65, %p66
    %p68 = scmp.ne.s32.totalorder %s54, %s55
    %p69 = scmp.eq.s32.totalorder %s21, 1
    %p70 = por %p68, %p69
    %p72 = scmp.ne.s32.totalorder %s55, %s71
    %p73 = scmp.eq.s32.totalorder %s21, 0
    %p74 = por %p72, %p73
    %s75 = ssub.s32 %s15, %s22
    %p76 = scmp.eq.s32.totalorder %s75, 0
    %s78 = sadd.s32 %s77, 1
    %s79 = scalar_select %p76, %s77, %s78
    %p82 = pneg %p76
    %p83 = scmp.eq.s32.totalorder %s15, 1
    %p84 = por %p82, %p83
    %p85 = scmp.ne.s32.totalorder %s77, %s80
    %p86 = scmp.eq.s32.totalorder %s15, 0
    %p87 = por %p85, %p86
    %p88 = scmp.ne.s32.totalorder %s77, %s80
    %p89 = scmp.eq.s32.totalorder %s20, 1
    %p90 = por %p88, %p89
    %p91 = scmp.ne.s32.totalorder %s80, %s81
    %p92 = scmp.eq.s32.totalorder %s20, 0
    %p93 = por %p91, %p92
    %p94 = scmp.ne.s32.totalorder %s80, %s81
    %p95 = scmp.eq.s32.totalorder %s21, 1
    %p96 = por %p94, %p95
    %p98 = scmp.ne.s32.totalorder %s81, %s97
    %p99 = scmp.eq.s32.totalorder %s21, 0
    %p100 = por %p98, %p99
    %s102 = sadd.s32 %s101, 1
    %p105 = scmp.eq.s32.totalorder %s15, 1
    %p106 = scmp.ne.s32.totalorder %s101, %s103
    %p107 = scmp.eq.s32.totalorder %s15, 0
    %p108 = por %p106, %p107
    %p109 = scmp.ne.s32.totalorder %s101, %s103
    %p110 = scmp.eq.s32.totalorder %s20, 1
    %p111 = por %p109, %p110
    %p112 = scmp.ne.s32.totalorder %s103, %s104
    %p113 = scmp.eq.s32.totalorder %s20, 0
    %p114 = por %p112, %p113
    %p115 = scmp.ne.s32.totalorder %s103, %s104
    %p116 = scmp.eq.s32.totalorder %s21, 1
    %p117 = por %p115, %p116
    %p119 = scmp.ne.s32.totalorder %s104, %s118
    %p120 = scmp.eq.s32.totalorder %s21, 0
    %p121 = por %p119, %p120
    %s123 = sadd.s32 %s122, 1
    %p126 = scmp.eq.s32.totalorder %s15, 1
    %p127 = scmp.ne.s32.totalorder %s122, %s124
    %p128 = scmp.eq.s32.totalorder %s15, 0
    %p129 = por %p127, %p128
    %p130 = scmp.ne.s32.totalorder %s122, %s124
    %p131 = scmp.eq.s32.totalorder %s20, 1
    %p132 = por %p130, %p131
    %p133 = scmp.ne.s32.totalorder %s124, %s125
    %p134 = scmp.eq.s32.totalorder %s20, 0
    %p135 = por %p133, %p134
    %p136 = scmp.ne.s32.totalorder %s124, %s125
    %p137 = scmp.eq.s32.totalorder %s21, 1
    %p138 = por %p136, %p137
    %p140 = scmp.ne.s32.totalorder %s125, %s139
    %p141 = scmp.eq.s32.totalorder %s21, 0
    %p142 = por %p140, %p141
    %s144 = sadd.s32 %s143, 1
    %p147 = scmp.eq.s32.totalorder %s15, 1
    %p148 = scmp.ne.s32.totalorder %s143, %s145
    %p149 = scmp.eq.s32.totalorder %s15, 0
    %p150 = por %p148, %p149
    %p151 = scmp.ne.s32.totalorder %s143, %s145
    %p152 = scmp.eq.s32.totalorder %s20, 1
    %p153 = por %p151, %p152
    %p154 = scmp.ne.s32.totalorder %s145, %s146
    %p155 = scmp.eq.s32.totalorder %s20, 0
    %p156 = por %p154, %p155
    %p157 = scmp.ne.s32.totalorder %s145, %s146
    %p158 = scmp.eq.s32.totalorder %s21, 1
    %p159 = por %p157, %p158
    %p161 = scmp.ne.s32.totalorder %s146, %s160
    %p162 = scmp.eq.s32.totalorder %s21, 0
    %p163 = por %p161, %p162
    %s165 = sadd.s32 %s164, 1
    %p168 = scmp.eq.s32.totalorder %s15, 1
    %p169 = scmp.ne.s32.totalorder %s164, %s166
    %p170 = scmp.eq.s32.totalorder %s15, 0
    %p171 = por %p169, %p170
    %p172 = scmp.ne.s32.totalorder %s164, %s166
    %p173 = scmp.eq.s32.totalorder %s20, 1
    %p174 = por %p172, %p173
    %p175 = scmp.ne.s32.totalorder %s166, %s167
    %p176 = scmp.eq.s32.totalorder %s20, 0
    %p177 = por %p175, %p176
    %p178 = scmp.ne.s32.totalorder %s166, %s167
    %p179 = scmp.eq.s32.totalorder %s21, 1
    %p180 = por %p178, %p179
    %p182 = scmp.ne.s32.totalorder %s167, %s181
    %p183 = scmp.eq.s32.totalorder %s21, 0
    %p184 = por %p182, %p183
    %s186 = sadd.s32 %s185, 1
    %p189 = scmp.eq.s32.totalorder %s15, 1
    %p190 = scmp.ne.s32.totalorder %s185, %s187
    %p191 = scmp.eq.s32.totalorder %s15, 0
    %p192 = por %p190, %p191
    %p193 = scmp.ne.s32.totalorder %s185, %s187
    %p194 = scmp.eq.s32.totalorder %s20, 1
    %p195 = por %p193, %p194
    %p196 = scmp.ne.s32.totalorder %s187, %s188
    %p197 = scmp.eq.s32.totalorder %s20, 0
    %p198 = por %p196, %p197
    %p199 = scmp.ne.s32.totalorder %s187, %s188
    %p200 = scmp.eq.s32.totalorder %s21, 1
    %p201 = por %p199, %p200
    %p203 = scmp.ne.s32.totalorder %s188, %s202
    %p204 = scmp.eq.s32.totalorder %s21, 0
    %p205 = por %p203, %p204
    %s207 = sadd.s32 %s206, 1
    %p210 = scmp.eq.s32.totalorder %s15, 1
    %p211 = scmp.ne.s32.totalorder %s206, %s208
    %p212 = scmp.eq.s32.totalorder %s15, 0
    %p213 = por %p211, %p212
    %p214 = scmp.ne.s32.totalorder %s206, %s208
    %p215 = scmp.eq.s32.totalorder %s20, 1
    %p216 = por %p214, %p215
    %p217 = scmp.ne.s32.totalorder %s208, %s209
    %p218 = scmp.eq.s32.totalorder %s20, 0
    %p219 = por %p217, %p218
    %p220 = scmp.ne.s32.totalorder %s208, %s209
    %p221 = scmp.eq.s32.totalorder %s21, 1
    %p222 = por %p220, %p221
    %p224 = scmp.ne.s32.totalorder %s209, %s223
    %p225 = scmp.eq.s32.totalorder %s21, 0
    %p226 = por %p224, %p225
    %s227 = ssub.s32 %s15, %s22
    %p228 = scmp.eq.s32.totalorder %s227, 0
    %s230 = sadd.s32 %s229, 1
    %s231 = scalar_select %p228, %s229, %s230
    %p234 = pneg %p228
    %p235 = scmp.eq.s32.totalorder %s15, 1
    %p236 = por %p234, %p235
    %p237 = scmp.ne.s32.totalorder %s229, %s232
    %p238 = scmp.eq.s32.totalorder %s15, 0
    %p239 = por %p237, %p238
    %p240 = scmp.ne.s32.totalorder %s229, %s232
    %p241 = scmp.eq.s32.totalorder %s20, 1
    %p242 = por %p240, %p241
    %p243 = scmp.ne.s32.totalorder %s232, %s233
    %p244 = scmp.eq.s32.totalorder %s20, 0
    %p245 = por %p243, %p244
    %p246 = scmp.ne.s32.totalorder %s232, %s233
    %p247 = scmp.eq.s32.totalorder %s21, 1
    %p248 = por %p246, %p247
    %p250 = scmp.ne.s32.totalorder %s233, %s249
    %p251 = scmp.eq.s32.totalorder %s21, 0
    %p252 = por %p250, %p251
    %p253 = scmp.le.s32.totalorder 1, %s15
    %p254 = scmp.lt.s32.totalorder %s15, 3
    %p255 = pnand %p253, %p254
    %p256 = pneg %p255
    // Predicated region
    $region9: #{bert_unilm_forward.5} parent=5 // pred_check
      _
    $region10: #{bert_unilm_forward.5} parent=5 // pred_check_branch
      %258 = sbr.rel (%p255) target = $region12
    $region11: #{bert_unilm_forward.5} parent=5 // pred_region
      %s259 = ssub.s32 %s15, 1
      // Predicated region
      $region13: #{bert_unilm_forward.5} parent=11 // pred_check
        %p260 = pneg %p114
      $region14: #{bert_unilm_forward.5} parent=11 // pred_check_branch
        %262 = sbr.rel (%p260) target = $region16
      $region15: #{bert_unilm_forward.5} parent=11 // pred_region
        _
      $region16: #{bert_unilm_forward.5} parent=11 // pred_fallthru
        _
      // Predicated region
      $region17: #{bert_unilm_forward.5} parent=11 // pred_check
        %p263 = pneg %p135
      $region18: #{bert_unilm_forward.5} parent=11 // pred_check_branch
        %265 = sbr.rel (%p263) target = $region20
      $region19: #{bert_unilm_forward.5} parent=11 // pred_region
        _
      $region20: #{bert_unilm_forward.5} parent=11 // pred_fallthru
        _
      // Predicated region
      $region21: #{bert_unilm_forward.5} parent=11 // pred_check
        %p266 = pneg %p156
      $region22: #{bert_unilm_forward.5} parent=11 // pred_check_branch
        %268 = sbr.rel (%p266) target = $region24
      $region23: #{bert_unilm_forward.5} parent=11 // pred_region
        _
      $region24: #{bert_unilm_forward.5} parent=11 // pred_fallthru
        _
      // Predicated region
      $region25: #{bert_unilm_forward.5} parent=11 // pred_check
        %p269 = pneg %p177
      $region26: #{bert_unilm_forward.5} parent=11 // pred_check_branch
        %271 = sbr.rel (%p269) target = $region28
      $region27: #{bert_unilm_forward.5} parent=11 // pred_region
        _
      $region28: #{bert_unilm_forward.5} parent=11 // pred_fallthru
        _
      // Predicated region
      $region29: #{bert_unilm_forward.5} parent=11 // pred_check
        %p272 = pneg %p198
      $region30: #{bert_unilm_forward.5} parent=11 // pred_check_branch
        %274 = sbr.rel (%p272) target = $region32
      $region31: #{bert_unilm_forward.5} parent=11 // pred_region
        _
      $region32: #{bert_unilm_forward.5} parent=11 // pred_fallthru
        _
      // Predicated region
      $region33: #{bert_unilm_forward.5} parent=11 // pred_check
        %p275 = pneg %p219
      $region34: #{bert_unilm_forward.5} parent=11 // pred_check_branch
        %277 = sbr.rel (%p275) target = $region36
      $region35: #{bert_unilm_forward.5} parent=11 // pred_region
        _
      $region36: #{bert_unilm_forward.5} parent=11 // pred_fallthru
        _
    $region12: #{bert_unilm_forward.5} parent=5 // pred_fallthru
      _
    %p278 = scmp.lt.s32.totalorder %s15, 2
    // Predicated region
    $region37: #{bert_unilm_forward.5} parent=5 // pred_check
      %p279 = pneg %p278
    $region38: #{bert_unilm_forward.5} parent=5 // pred_check_branch
      %281 = sbr.rel (%p279) target = $region40
    $region39: #{bert_unilm_forward.5} parent=5 // pred_region
      // Predicated region
      $region41: #{bert_unilm_forward.5} parent=39 // pred_check
        %p282 = pneg %p35
      $region42: #{bert_unilm_forward.5} parent=39 // pred_check_branch
        %284 = sbr.rel (%p282) target = $region44
      $region43: #{bert_unilm_forward.5} parent=39 // pred_region
        %p285 = scmp.lt.s32.totalorder %s15, 1
        %s286 = scalar_select %p285, %s15, 1
        %s287 = smul.addr %s286, 4
        %s288 = scalar_lea.vmem %s0, %s287
      $region44: #{bert_unilm_forward.5} parent=39 // pred_fallthru
        _
      // Predicated region
      $region45: #{bert_unilm_forward.5} parent=39 // pred_check
        %p289 = pneg %p61
      $region46: #{bert_unilm_forward.5} parent=39 // pred_check_branch
        %291 = sbr.rel (%p289) target = $region48
      $region47: #{bert_unilm_forward.5} parent=39 // pred_region
        %p292 = scmp.lt.s32.totalorder %s15, 1
        %s293 = scalar_select %p292, %s15, 1
        %s294 = scalar_lea.vmem %s1, %s293
      $region48: #{bert_unilm_forward.5} parent=39 // pred_fallthru
        _
      // Predicated region
      $region49: #{bert_unilm_forward.5} parent=39 // pred_check
        %p295 = pneg %p87
      $region50: #{bert_unilm_forward.5} parent=39 // pred_check_branch
        %297 = sbr.rel (%p295) target = $region52
      $region51: #{bert_unilm_forward.5} parent=39 // pred_region
        %p298 = scmp.lt.s32.totalorder %s15, 1
        %s299 = scalar_select %p298, %s15, 1
        %s300 = scalar_lea.vmem %s2, %s299
      $region52: #{bert_unilm_forward.5} parent=39 // pred_fallthru
        _
    $region40: #{bert_unilm_forward.5} parent=5 // pred_fallthru
      _
    %p301 = scmp.le.s32.totalorder 1, %s15
    %p302 = scmp.lt.s32.totalorder %s15, 3
    %p303 = pnand %p301, %p302
    %p304 = pneg %p303
    // Predicated region
    $region53: #{bert_unilm_forward.5} parent=5 // pred_check
      _
    $region54: #{bert_unilm_forward.5} parent=5 // pred_check_branch
      %306 = sbr.rel (%p303) target = $region56
    $region55: #{bert_unilm_forward.5} parent=5 // pred_region
      %s307 = ssub.s32 %s15, 1
      %p308 = scmp.lt.s32.totalorder %s20, 1
      %s309 = scalar_select %p308, %s20, 1
      %s310 = smul.addr %s309, 4
      %s311 = scalar_lea.vmem %s0, %s310
      %p312 = pneg %p41
      %p313 = pneg %p38
      %p314 = scmp.lt.s32.totalorder %s20, 1
      %s315 = scalar_select %p314, %s20, 1
      %s316 = scalar_lea.vmem %s1, %s315
      %p317 = pneg %p67
      %p318 = pneg %p64
      %p319 = scmp.lt.s32.totalorder %s20, 1
      %s320 = scalar_select %p319, %s20, 1
      %s321 = scalar_lea.vmem %s2, %s320
      %p322 = pneg %p93
      %p323 = pneg %p90
      %p324 = pneg %p114
      %p325 = pneg %p111
      %p326 = pneg %p135
      %p327 = pneg %p132
      %p328 = pneg %p156
      %p329 = pneg %p153
      %p330 = pneg %p177
      %p331 = pneg %p174
      %p332 = pneg %p198
      %p333 = pneg %p195
      %p334 = pneg %p219
      %p335 = pneg %p216
      %p336 = pneg %p245
      %p337 = pneg %p242
      %p338 = scmp.lt.s32.totalorder %s20, 1
      %s339 = scalar_select %p338, %s20, 1
      %s340 = smul.addr %s339, 4
      %s341 = scalar_lea.vmem %s9, %s340
      %p342 = scmp.lt.s32.totalorder %s20, 1
      %s343 = scalar_select %p342, %s20, 1
      %s344 = smul.addr %s343, 4
      %s345 = scalar_lea.vmem %s0, %s344
      %p346 = scmp.lt.s32.totalorder %s20, 1
      %s347 = scalar_select %p346, %s20, 1
      %s348 = scalar_lea.vmem %s1, %s347
      %p349 = scmp.lt.s32.totalorder %s20, 1
      %s350 = scalar_select %p349, %s20, 1
      %s351 = scalar_lea.vmem %s2, %s350
      %p352 = scmp.lt.s32.totalorder %s20, 1
      %s353 = scalar_select %p352, %s20, 1
      %s354 = smul.addr %s353, 4
      %s355 = scalar_lea.vmem %s9, %s354
      %v357 = vld [vmem:[%s345] sm:$0xf]
      %v358 = vld [vmem:[%s3] sm:$0xf]
      %v359 = vld [vmem:[%s3 + $0x4] sm:$0xf]
      %v360 = vld [vmem:[%s3 + $0x8] sm:$0xf]
      %v361 = vld [vmem:[%s3 + $0xc] sm:$0xf]
      %v362 = vld [vmem:[%s4] sm:$0x1]
      %v364 = vlaneseq
      %v365 = vshrl.u32 %v364, 7
      %v366 = vsub.s32 0, %v365
      %v367 = vrot.slane %v362, %v366
      %v373 = vunpack.c.l.b16 %v358
      %v374 = vunpack.c.l.b16 %v359
      %v375 = vunpack.c.l.b16 %v360
      %v376 = vunpack.c.l.b16 %v361
      %v377 = vpack.c.b16 %v374, %v373
      %v378 = vpack.c.b16 %v376, %v375
      %vm381 = vcmask 261120
      %v383 = vsel %vm381, %v357, 0
      %385 = vmatprep.subr.bf16.mxu0 0
      %386 = vmatpush1.bf16.msra.mxu0 %v377
      %387 = vmatprep.subr.bf16.mxu0 0
      %388 = vmatpush1.bf16.msra.mxu0 %v378
      %389 = vmatprep.subr.bf16.mxu0 0
      %390 = vmatpush1.bf16.msra.mxu0 0
      %391 = vmatprep.subr.bf16.mxu0 0
      %392 = vmatpush1.bf16.msra.mxu0 0
      %393 = vmatprep.subr.bf16.mxu0 0
      %394 = vmatpush1.bf16.msra.mxu0 0
      %395 = vmatprep.subr.bf16.mxu0 0
      %396 = vmatpush1.bf16.msra.mxu0 0
      %397 = vmatprep.subr.bf16.mxu0 0
      %398 = vmatpush1.bf16.msra.mxu0 0
      %399 = vmatprep.subr.bf16.mxu0 0
      %400 = vmatpush1.bf16.msra.mxu0 0
      %401 = vmatprep.subr.bf16.mxu0 0
      %402 = vmatpush1.bf16.msra.mxu0 0
      %403 = vmatprep.subr.bf16.mxu0 0
      %404 = vmatpush1.bf16.msra.mxu0 0
      %405 = vmatprep.subr.bf16.mxu0 0
      %406 = vmatpush1.bf16.msra.mxu0 0
      %407 = vmatprep.subr.bf16.mxu0 0
      %408 = vmatpush1.bf16.msra.mxu0 0
      %409 = vmatprep.subr.bf16.mxu0 0
      %410 = vmatpush1.bf16.msra.mxu0 0
      %411 = vmatprep.subr.bf16.mxu0 0
      %412 = vmatpush1.bf16.msra.mxu0 0
      %413 = vmatprep.subr.bf16.mxu0 0
      %414 = vmatpush1.bf16.msra.mxu0 0
      %415 = vmatprep.subr.bf16.mxu0 0
      %416 = vmatpush1.bf16.msra.mxu0 0
      %417 = vmatprep.mubr.bf16.mxu0 0
      %418 = vmatmul.mubr.bf16.gmra.mrb[0].mxu0 %v383
      %v419 = vpop.f32.mrb[0].mxu0
      %v420 = vadd.f32 %v367, %v419
      %v421 = vpop.f32.mrb[0].mxu0
      %v422 = vpop.f32.mrb[0].mxu0
      %v423 = vpop.f32.mrb[0].mxu0
      %424 = vdwg.mxu0
      %vm425 = vcmask 785408
      %426 = vst.msk [vmem:[#allocation2] sm:$0xff] %vm425, %v420
      %v427 = vlaneseq
      %v428 = vshrl.u32 %v427, 7
      %v429 = vlaneseq
      %v430 = vand.u32 %v429, 127
      %v431 = vld [vmem:[%s348] sm:$0x1]
      %v432 = vld [vmem:[%s351] sm:$0x1]
      %vm433 = vcmp.le.s32.totalorder %v430, %v428
      %v435 = vlaneseq
      %v436 = vshrl.u32 %v435, 7
      %v437 = vsub.s32 0, %v436
      %v438 = vrot.slane %v431, %v437
      %v440 = vsel %vm433, %v438, 0.0
      %v442 = vlaneseq
      %v443 = vshrl.u32 %v442, 7
      %v444 = vsub.s32 0, %v443
      %v445 = vrot.slane %v432, %v444
      %v447 = vadd.f32 %v440, %v445
      %v448 = vmax.f32 %v447, 0.0
      %v449 = vmin.f32 %v448, 1.0
      %v450 = vsub.f32 1.0, %v449
      %v451 = vmul.f32 %v450, -10000.0
      %v452 = vunpack.c.l.bf16 %v357
      %v453 = vld [vmem:[%s6] sm:$0x1]
      %v455 = vlaneseq
      %v456 = vshrl.u32 %v455, 7
      %v457 = vsub.s32 0, %v456
      %v458 = vrot.slane %v453, %v457
      %v460 = vadd.f32 %v452, %v458
      %461 = vst.msk [vmem:[#allocation3] sm:$0xff] %vm381, %v460
      %v462 = vld [vmem:[#allocation2] sm:$0xff]
      %v463 = vpack.c.bf16 %v462, %v462
      %465 = vrot.lane.b32.xlu0 %v463, 96
      %v466 = vpop.permute.xlu0 %465
      %vm467 = vcmask 64512
      %v469 = vsel %vm467, %v463, 0
      %v472 = vsel %vm467, %v466, 0
      %474 = vmatprep.subr.bf16.mxu0 0
      %475 = vmatpush1.bf16.xpose.msra.mxu0 %v472
      %476 = vmatprep.subr.bf16.mxu0 0
      %477 = vmatpush1.bf16.xpose.msra.mxu0 0
      %478 = vmatprep.subr.bf16.mxu0 0
      %479 = vmatpush1.bf16.xpose.msra.mxu0 0
      %480 = vmatprep.subr.bf16.mxu0 0
      %481 = vmatpush1.bf16.xpose.msra.mxu0 0
      %482 = vmatprep.subr.bf16.mxu0 0
      %483 = vmatpush1.bf16.xpose.msra.mxu0 0
      %484 = vmatprep.subr.bf16.mxu0 0
      %485 = vmatpush1.bf16.xpose.msra.mxu0 0
      %486 = vmatprep.subr.bf16.mxu0 0
      %487 = vmatpush1.bf16.xpose.msra.mxu0 0
      %488 = vmatprep.subr.bf16.mxu0 0
      %489 = vmatpush1.bf16.xpose.msra.mxu0 0
      %490 = vmatprep.subr.bf16.mxu0 0
      %491 = vmatpush1.bf16.xpose.msra.mxu0 0
      %492 = vmatprep.subr.bf16.mxu0 0
      %493 = vmatpush1.bf16.xpose.msra.mxu0 0
      %494 = vmatprep.subr.bf16.mxu0 0
      %495 = vmatpush1.bf16.xpose.msra.mxu0 0
      %496 = vmatprep.subr.bf16.mxu0 0
      %497 = vmatpush1.bf16.xpose.msra.mxu0 0
      %498 = vmatprep.subr.bf16.mxu0 0
      %499 = vmatpush1.bf16.xpose.msra.mxu0 0
      %500 = vmatprep.subr.bf16.mxu0 0
      %501 = vmatpush1.bf16.xpose.msra.mxu0 0
      %502 = vmatprep.subr.bf16.mxu0 0
      %503 = vmatpush1.bf16.xpose.msra.mxu0 0
      %504 = vmatprep.subr.bf16.mxu0 0
      %505 = vmatpush1.bf16.xpose.msra.mxu0 0
      %506 = vmatprep.mubr.bf16.mxu0 0
      %507 = vmatmul.mubr.bf16.gmra.mrb[0].mxu0 %v469
      %v508 = vpop.f32.mrb[0].mxu0
      %v509 = vadd.f32 %v451, %v508
      %v510 = vpop.f32.mrb[0].mxu0
      %v511 = vpop.f32.mrb[0].mxu0
      %v512 = vpop.f32.mrb[0].mxu0
      %513 = vdwg.mxu0
      %v514 = vsel %vm467, %v509, -inf
      %515 = vmax.xlane.f32.xlu0 %v514
      %v516 = vpop.xlane.xlu0 %515
      %v517 = vsub.f32 %v509, %v516
      %v518 = vmul.f32 %v517, 1.442695
      %v519 = vpow.pop %v518
      %v520 = vsel %vm467, %v519, 0.0
      %521 = vadd.xlane.f32.xlu0 %v520
      %v522 = vpop.xlane.xlu0 %521
      %v523 = vpack.c.bf16 %v519, %v519
      %524 = vrot.lane.b32.xlu0 %v463, 64
      %v525 = vpop.permute.xlu0 %524
      %v527 = vsel %vm467, %v523, 0
      %vm529 = vcmask 1043456
      %v531 = vsel %vm529, %v525, 0
      %533 = vmatprep.subr.bf16.mxu0 0
      %534 = vmatpush1.bf16.msra.mxu0 %v531
      %535 = vmatprep.subr.bf16.mxu0 0
      %536 = vmatpush1.bf16.msra.mxu0 0
      %537 = vmatprep.subr.bf16.mxu0 0
      %538 = vmatpush1.bf16.msra.mxu0 0
      %539 = vmatprep.subr.bf16.mxu0 0
      %540 = vmatpush1.bf16.msra.mxu0 0
      %541 = vmatprep.subr.bf16.mxu0 0
      %542 = vmatpush1.bf16.msra.mxu0 0
      %543 = vmatprep.subr.bf16.mxu0 0
      %544 = vmatpush1.bf16.msra.mxu0 0
      %545 = vmatprep.subr.bf16.mxu0 0
      %546 = vmatpush1.bf16.msra.mxu0 0
      %547 = vmatprep.subr.bf16.mxu0 0
      %548 = vmatpush1.bf16.msra.mxu0 0
      %549 = vmatprep.subr.bf16.mxu0 0
      %550 = vmatpush1.bf16.msra.mxu0 0
      %551 = vmatprep.subr.bf16.mxu0 0
      %552 = vmatpush1.bf16.msra.mxu0 0
      %553 = vmatprep.subr.bf16.mxu0 0
      %554 = vmatpush1.bf16.msra.mxu0 0
      %555 = vmatprep.subr.bf16.mxu0 0
      %556 = vmatpush1.bf16.msra.mxu0 0
      %557 = vmatprep.subr.bf16.mxu0 0
      %558 = vmatpush1.bf16.msra.mxu0 0
      %559 = vmatprep.subr.bf16.mxu0 0
      %560 = vmatpush1.bf16.msra.mxu0 0
      %561 = vmatprep.subr.bf16.mxu0 0
      %562 = vmatpush1.bf16.msra.mxu0 0
      %563 = vmatprep.subr.bf16.mxu0 0
      %564 = vmatpush1.bf16.msra.mxu0 0
      %565 = vmatprep.mubr.bf16.mxu0 0
      %566 = vmatmul.mubr.bf16.gmra.mrb[0].mxu0 %v527
      %v567 = vpop.f32.mrb[0].mxu0
      %v568 = vadd.f32 0.0, %v567
      %v569 = vpop.f32.mrb[0].mxu0
      %v570 = vpop.f32.mrb[0].mxu0
      %v571 = vpop.f32.mrb[0].mxu0
      %572 = vdwg.mxu0
      %v573 = vrcp.pop %v522
      %v574 = vmul.f32 %v568, %v573
      %v575 = vld [vmem:[#allocation3] sm:$0xff]
      %v576 = vpack.c.bf16 %v574, %v574
      %v577 = vld [vmem:[%s5] sm:$0xf]
      %v579 = vsel %vm467, %v576, 0
      %v582 = vsel %vm529, %v577, 0
      %584 = vmatprep.subr.bf16.mxu0 0
      %585 = vmatpush1.bf16.msra.mxu0 %v582
      %586 = vmatprep.subr.bf16.mxu0 0
      %587 = vmatpush1.bf16.msra.mxu0 0
      %588 = vmatprep.subr.bf16.mxu0 0
      %589 = vmatpush1.bf16.msra.mxu0 0
      %590 = vmatprep.subr.bf16.mxu0 0
      %591 = vmatpush1.bf16.msra.mxu0 0
      %592 = vmatprep.subr.bf16.mxu0 0
      %593 = vmatpush1.bf16.msra.mxu0 0
      %594 = vmatprep.subr.bf16.mxu0 0
      %595 = vmatpush1.bf16.msra.mxu0 0
      %596 = vmatprep.subr.bf16.mxu0 0
      %597 = vmatpush1.bf16.msra.mxu0 0
      %598 = vmatprep.subr.bf16.mxu0 0
      %599 = vmatpush1.bf16.msra.mxu0 0
      %600 = vmatprep.subr.bf16.mxu0 0
      %601 = vmatpush1.bf16.msra.mxu0 0
      %602 = vmatprep.subr.bf16.mxu0 0
      %603 = vmatpush1.bf16.msra.mxu0 0
      %604 = vmatprep.subr.bf16.mxu0 0
      %605 = vmatpush1.bf16.msra.mxu0 0
      %606 = vmatprep.subr.bf16.mxu0 0
      %607 = vmatpush1.bf16.msra.mxu0 0
      %608 = vmatprep.subr.bf16.mxu0 0
      %609 = vmatpush1.bf16.msra.mxu0 0
      %610 = vmatprep.subr.bf16.mxu0 0
      %611 = vmatpush1.bf16.msra.mxu0 0
      %612 = vmatprep.subr.bf16.mxu0 0
      %613 = vmatpush1.bf16.msra.mxu0 0
      %614 = vmatprep.subr.bf16.mxu0 0
      %615 = vmatpush1.bf16.msra.mxu0 0
      %616 = vmatprep.mubr.bf16.mxu0 0
      %617 = vmatmul.mubr.bf16.gmra.mrb[0].mxu0 %v579
      %v618 = vpop.f32.mrb[0].mxu0
      %v619 = vadd.f32 0.0, %v618
      %v620 = vpop.f32.mrb[0].mxu0
      %v621 = vpop.f32.mrb[0].mxu0
      %v622 = vpop.f32.mrb[0].mxu0
      %623 = vdwg.mxu0
      %v624 = vadd.f32 %v575, %v619
      %625 = vst.msk [vmem:[#allocation3] sm:$0xff] %vm381, %v624
      %v626 = vld [vmem:[#allocation2] sm:$0xff]
      %v627 = vpack.c.bf16 %v626, %v626
      %629 = vrot.lane.b32.xlu0 %v627, 120
      %v630 = vpop.permute.xlu0 %629
      %631 = vrot.lane.b32.xlu0 %v627, 88
      %v632 = vpop.permute.xlu0 %631
      %v634 = vsel %vm467, %v630, 0
      %v637 = vsel %vm467, %v632, 0
      %639 = vmatprep.subr.bf16.mxu0 0
      %640 = vmatpush1.bf16.xpose.msra.mxu0 %v637
      %641 = vmatprep.subr.bf16.mxu0 0
      %642 = vmatpush1.bf16.xpose.msra.mxu0 0
      %643 = vmatprep.subr.bf16.mxu0 0
      %644 = vmatpush1.bf16.xpose.msra.mxu0 0
      %645 = vmatprep.subr.bf16.mxu0 0
      %646 = vmatpush1.bf16.xpose.msra.mxu0 0
      %647 = vmatprep.subr.bf16.mxu0 0
      %648 = vmatpush1.bf16.xpose.msra.mxu0 0
      %649 = vmatprep.subr.bf16.mxu0 0
      %650 = vmatpush1.bf16.xpose.msra.mxu0 0
      %651 = vmatprep.subr.bf16.mxu0 0
      %652 = vmatpush1.bf16.xpose.msra.mxu0 0
      %653 = vmatprep.subr.bf16.mxu0 0
      %654 = vmatpush1.bf16.xpose.msra.mxu0 0
      %655 = vmatprep.subr.bf16.mxu0 0
      %656 = vmatpush1.bf16.xpose.msra.mxu0 0
      %657 = vmatprep.subr.bf16.mxu0 0
      %658 = vmatpush1.bf16.xpose.msra.mxu0 0
      %659 = vmatprep.subr.bf16.mxu0 0
      %660 = vmatpush1.bf16.xpose.msra.mxu0 0
      %661 = vmatprep.subr.bf16.mxu0 0
      %662 = vmatpush1.bf16.xpose.msra.mxu0 0
      %663 = vmatprep.subr.bf16.mxu0 0
      %664 = vmatpush1.bf16.xpose.msra.mxu0 0
      %665 = vmatprep.subr.bf16.mxu0 0
      %666 = vmatpush1.bf16.xpose.msra.mxu0 0
      %667 = vmatprep.subr.bf16.mxu0 0
      %668 = vmatpush1.bf16.xpose.msra.mxu0 0
      %669 = vmatprep.subr.bf16.mxu0 0
      %670 = vmatpush1.bf16.xpose.msra.mxu0 0
      %671 = vmatprep.mubr.bf16.mxu0 0
      %672 = vmatmul.mubr.bf16.gmra.mrb[0].mxu0 %v634
      %v673 = vpop.f32.mrb[0].mxu0
      %v674 = vadd.f32 %v451, %v673
      %v675 = vpop.f32.mrb[0].mxu0
      %v676 = vpop.f32.mrb[0].mxu0
      %v677 = vpop.f32.mrb[0].mxu0
      %678 = vdwg.mxu0
      %v679 = vsel %vm467, %v674, -inf
      %680 = vmax.xlane.f32.xlu0 %v679
      %v681 = vpop.xlane.xlu0 %680
      %v682 = vsub.f32 %v674, %v681
      %v683 = vmul.f32 %v682, 1.442695
      %v684 = vpow.pop %v683
      %v685 = vsel %vm467, %v684, 0.0
      %686 = vadd.xlane.f32.xlu0 %v685
      %v687 = vpop.xlane.xlu0 %686
      %v688 = vpack.c.bf16 %v684, %v684
      %689 = vrot.lane.b32.xlu0 %v627, 56
      %v690 = vpop.permute.xlu0 %689
      %v692 = vsel %vm467, %v688, 0
      %v695 = vsel %vm529, %v690, 0
      %697 = vmatprep.subr.bf16.mxu0 0
      %698 = vmatpush1.bf16.msra.mxu0 %v695
      %699 = vmatprep.subr.bf16.mxu0 0
      %700 = vmatpush1.bf16.msra.mxu0 0
      %701 = vmatprep.subr.bf16.mxu0 0
      %702 = vmatpush1.bf16.msra.mxu0 0
      %703 = vmatprep.subr.bf16.mxu0 0
      %704 = vmatpush1.bf16.msra.mxu0 0
      %705 = vmatprep.subr.bf16.mxu0 0
      %706 = vmatpush1.bf16.msra.mxu0 0
      %707 = vmatprep.subr.bf16.mxu0 0
      %708 = vmatpush1.bf16.msra.mxu0 0
      %709 = vmatprep.subr.bf16.mxu0 0
      %710 = vmatpush1.bf16.msra.mxu0 0
      %711 = vmatprep.subr.bf16.mxu0 0
      %712 = vmatpush1.bf16.msra.mxu0 0
      %713 = vmatprep.subr.bf16.mxu0 0
      %714 = vmatpush1.bf16.msra.mxu0 0
      %715 = vmatprep.subr.bf16.mxu0 0
      %716 = vmatpush1.bf16.msra.mxu0 0
      %717 = vmatprep.subr.bf16.mxu0 0
      %718 = vmatpush1.bf16.msra.mxu0 0
      %719 = vmatprep.subr.bf16.mxu0 0
      %720 = vmatpush1.bf16.msra.mxu0 0
      %721 = vmatprep.subr.bf16.mxu0 0
      %722 = vmatpush1.bf16.msra.mxu0 0
      %723 = vmatprep.subr.bf16.mxu0 0
      %724 = vmatpush1.bf16.msra.mxu0 0
      %725 = vmatprep.subr.bf16.mxu0 0
      %726 = vmatpush1.bf16.msra.mxu0 0
      %727 = vmatprep.subr.bf16.mxu0 0
      %728 = vmatpush1.bf16.msra.mxu0 0
      %729 = vmatprep.mubr.bf16.mxu0 0
      %730 = vmatmul.mubr.bf16.gmra.mrb[0].mxu0 %v692
      %v731 = vpop.f32.mrb[0].mxu0
      %v732 = vadd.f32 0.0, %v731
      %v733 = vpop.f32.mrb[0].mxu0
      %v734 = vpop.f32.mrb[0].mxu0
      %v735 = vpop.f32.mrb[0].mxu0
      %736 = vdwg.mxu0
      %v737 = vrcp.pop %v687
      %v738 = vmul.f32 %v732, %v737
      %v739 = vld [vmem:[#allocation3] sm:$0xff]
      %v740 = vpack.c.bf16 %v738, %v738
      %s741 = scalar_lea.vmem %s5, 4
      %v742 = vld [vmem:[%s741] sm:$0xf]
      %v744 = vsel %vm467, %v740, 0
      %v747 = vsel %vm529, %v742, 0
      %749 = vmatprep.subr.bf16.mxu0 0
      %750 = vmatpush1.bf16.msra.mxu0 %v747
      %751 = vmatprep.subr.bf16.mxu0 0
      %752 = vmatpush1.bf16.msra.mxu0 0
      %753 = vmatprep.subr.bf16.mxu0 0
      %754 = vmatpush1.bf16.msra.mxu0 0
      %755 = vmatprep.subr.bf16.mxu0 0
      %756 = vmatpush1.bf16.msra.mxu0 0
      %757 = vmatprep.subr.bf16.mxu0 0
      %758 = vmatpush1.bf16.msra.mxu0 0
      %759 = vmatprep.subr.bf16.mxu0 0
      %760 = vmatpush1.bf16.msra.mxu0 0
      %761 = vmatprep.subr.bf16.mxu0 0
      %762 = vmatpush1.bf16.msra.mxu0 0
      %763 = vmatprep.subr.bf16.mxu0 0
      %764 = vmatpush1.bf16.msra.mxu0 0
      %765 = vmatprep.subr.bf16.mxu0 0
      %766 = vmatpush1.bf16.msra.mxu0 0
      %767 = vmatprep.subr.bf16.mxu0 0
      %768 = vmatpush1.bf16.msra.mxu0 0
      %769 = vmatprep.subr.bf16.mxu0 0
      %770 = vmatpush1.bf16.msra.mxu0 0
      %771 = vmatprep.subr.bf16.mxu0 0
      %772 = vmatpush1.bf16.msra.mxu0 0
      %773 = vmatprep.subr.bf16.mxu0 0
      %774 = vmatpush1.bf16.msra.mxu0 0
      %775 = vmatprep.subr.bf16.mxu0 0
      %776 = vmatpush1.bf16.msra.mxu0 0
      %777 = vmatprep.subr.bf16.mxu0 0
      %778 = vmatpush1.bf16.msra.mxu0 0
      %779 = vmatprep.subr.bf16.mxu0 0
      %780 = vmatpush1.bf16.msra.mxu0 0
      %781 = vmatprep.mubr.bf16.mxu0 0
      %782 = vmatmul.mubr.bf16.gmra.mrb[0].mxu0 %v744
      %v783 = vpop.f32.mrb[0].mxu0
      %v784 = vadd.f32 0.0, %v783
      %v785 = vpop.f32.mrb[0].mxu0
      %v786 = vpop.f32.mrb[0].mxu0
      %v787 = vpop.f32.mrb[0].mxu0
      %788 = vdwg.mxu0
      %v789 = vadd.f32 %v739, %v784
      %790 = vst.msk [vmem:[#allocation3] sm:$0xff] %vm381, %v789
      %v791 = vld [vmem:[#allocation2] sm:$0xff]
      %v792 = vpack.c.bf16 %v791, %v791
      %794 = vrot.lane.b32.xlu0 %v792, 112
      %v795 = vpop.permute.xlu0 %794
      %796 = vrot.lane.b32.xlu0 %v792, 80
      %v797 = vpop.permute.xlu0 %796
      %v799 = vsel %vm467, %v795, 0
      %v802 = vsel %vm467, %v797, 0
      %804 = vmatprep.subr.bf16.mxu0 0
      %805 = vmatpush1.bf16.xpose.msra.mxu0 %v802
      %806 = vmatprep.subr.bf16.mxu0 0
      %807 = vmatpush1.bf16.xpose.msra.mxu0 0
      %808 = vmatprep.subr.bf16.mxu0 0
      %809 = vmatpush1.bf16.xpose.msra.mxu0 0
      %810 = vmatprep.subr.bf16.mxu0 0
      %811 = vmatpush1.bf16.xpose.msra.mxu0 0
      %812 = vmatprep.subr.bf16.mxu0 0
      %813 = vmatpush1.bf16.xpose.msra.mxu0 0
      %814 = vmatprep.subr.bf16.mxu0 0
      %815 = vmatpush1.bf16.xpose.msra.mxu0 0
      %816 = vmatprep.subr.bf16.mxu0 0
      %817 = vmatpush1.bf16.xpose.msra.mxu0 0
      %818 = vmatprep.subr.bf16.mxu0 0
      %819 = vmatpush1.bf16.xpose.msra.mxu0 0
      %820 = vmatprep.subr.bf16.mxu0 0
      %821 = vmatpush1.bf16.xpose.msra.mxu0 0
      %822 = vmatprep.subr.bf16.mxu0 0
      %823 = vmatpush1.bf16.xpose.msra.mxu0 0
      %824 = vmatprep.subr.bf16.mxu0 0
      %825 = vmatpush1.bf16.xpose.msra.mxu0 0
      %826 = vmatprep.subr.bf16.mxu0 0
      %827 = vmatpush1.bf16.xpose.msra.mxu0 0
      %828 = vmatprep.subr.bf16.mxu0 0
      %829 = vmatpush1.bf16.xpose.msra.mxu0 0
      %830 = vmatprep.subr.bf16.mxu0 0
      %831 = vmatpush1.bf16.xpose.msra.mxu0 0
      %832 = vmatprep.subr.bf16.mxu0 0
      %833 = vmatpush1.bf16.xpose.msra.mxu0 0
      %834 = vmatprep.subr.bf16.mxu0 0
      %835 = vmatpush1.bf16.xpose.msra.mxu0 0
      %836 = vmatprep.mubr.bf16.mxu0 0
      %837 = vmatmul.mubr.bf16.gmra.mrb[0].mxu0 %v799
      %v838 = vpop.f32.mrb[0].mxu0
      %v839 = vadd.f32 %v451, %v838
      %v840 = vpop.f32.mrb[0].mxu0
      %v841 = vpop.f32.mrb[0].mxu0
      %v842 = vpop.f32.mrb[0].mxu0
      %843 = vdwg.mxu0
      %v844 = vsel %vm467, %v839, -inf
      %845 = vmax.xlane.f32.xlu0 %v844
      %v846 = vpop.xlane.xlu0 %845
      %v847 = vsub.f32 %v839, %v846
      %v848 = vmul.f32 %v847, 1.442695
      %v849 = vpow.pop %v848
      %v850 = vsel %vm467, %v849, 0.0
      %851 = vadd.xlane.f32.xlu0 %v850
      %v852 = vpop.xlane.xlu0 %851
      %v853 = vpack.c.bf16 %v849, %v849
      %854 = vrot.lane.b32.xlu0 %v792, 48
      %v855 = vpop.permute.xlu0 %854
      %v857 = vsel %vm467, %v853, 0
      %v860 = vsel %vm529, %v855, 0
      %862 = vmatprep.subr.bf16.mxu0 0
      %863 = vmatpush1.bf16.msra.mxu0 %v860
      %864 = vmatprep.subr.bf16.mxu0 0
      %865 = vmatpush1.bf16.msra.mxu0 0
      %866 = vmatprep.subr.bf16.mxu0 0
      %867 = vmatpush1.bf16.msra.mxu0 0
      %868 = vmatprep.subr.bf16.mxu0 0
      %869 = vmatpush1.bf16.msra.mxu0 0
      %870 = vmatprep.subr.bf16.mxu0 0
      %871 = vmatpush1.bf16.msra.mxu0 0
      %872 = vmatprep.subr.bf16.mxu0 0
      %873 = vmatpush1.bf16.msra.mxu0 0
      %874 = vmatprep.subr.bf16.mxu0 0
      %875 = vmatpush1.bf16.msra.mxu0 0
      %876 = vmatprep.subr.bf16.mxu0 0
      %877 = vmatpush1.bf16.msra.mxu0 0
      %878 = vmatprep.subr.bf16.mxu0 0
      %879 = vmatpush1.bf16.msra.mxu0 0
      %880 = vmatprep.subr.bf16.mxu0 0
      %881 = vmatpush1.bf16.msra.mxu0 0
      %882 = vmatprep.subr.bf16.mxu0 0
      %883 = vmatpush1.bf16.msra.mxu0 0
      %884 = vmatprep.subr.bf16.mxu0 0
      %885 = vmatpush1.bf16.msra.mxu0 0
      %886 = vmatprep.subr.bf16.mxu0 0
      %887 = vmatpush1.bf16.msra.mxu0 0
      %888 = vmatprep.subr.bf16.mxu0 0
      %889 = vmatpush1.bf16.msra.mxu0 0
      %890 = vmatprep.subr.bf16.mxu0 0
      %891 = vmatpush1.bf16.msra.mxu0 0
      %892 = vmatprep.subr.bf16.mxu0 0
      %893 = vmatpush1.bf16.msra.mxu0 0
      %894 = vmatprep.mubr.bf16.mxu0 0
      %895 = vmatmul.mubr.bf16.gmra.mrb[0].mxu0 %v857
      %v896 = vpop.f32.mrb[0].mxu0
      %v897 = vadd.f32 0.0, %v896
      %v898 = vpop.f32.mrb[0].mxu0
      %v899 = vpop.f32.mrb[0].mxu0
      %v900 = vpop.f32.mrb[0].mxu0
      %901 = vdwg.mxu0
      %v902 = vrcp.pop %v852
      %v903 = vmul.f32 %v897, %v902
      %v904 = vld [vmem:[#allocation3] sm:$0xff]
      %v905 = vpack.c.bf16 %v903, %v903
      %s906 = scalar_lea.vmem %s5, 8
      %v907 = vld [vmem:[%s906] sm:$0xf]
      %v909 = vsel %vm467, %v905, 0
      %v912 = vsel %vm529, %v907, 0
      %914 = vmatprep.subr.bf16.mxu0 0
      %915 = vmatpush1.bf16.msra.mxu0 %v912
      %916 = vmatprep.subr.bf16.mxu0 0
      %917 = vmatpush1.bf16.msra.mxu0 0
      %918 = vmatprep.subr.bf16.mxu0 0
      %919 = vmatpush1.bf16.msra.mxu0 0
      %920 = vmatprep.subr.bf16.mxu0 0
      %921 = vmatpush1.bf16.msra.mxu0 0
      %922 = vmatprep.subr.bf16.mxu0 0
      %923 = vmatpush1.bf16.msra.mxu0 0
      %924 = vmatprep.subr.bf16.mxu0 0
      %925 = vmatpush1.bf16.msra.mxu0 0
      %926 = vmatprep.subr.bf16.mxu0 0
      %927 = vmatpush1.bf16.msra.mxu0 0
      %928 = vmatprep.subr.bf16.mxu0 0
      %929 = vmatpush1.bf16.msra.mxu0 0
      %930 = vmatprep.subr.bf16.mxu0 0
      %931 = vmatpush1.bf16.msra.mxu0 0
      %932 = vmatprep.subr.bf16.mxu0 0
      %933 = vmatpush1.bf16.msra.mxu0 0
      %934 = vmatprep.subr.bf16.mxu0 0
      %935 = vmatpush1.bf16.msra.mxu0 0
      %936 = vmatprep.subr.bf16.mxu0 0
      %937 = vmatpush1.bf16.msra.mxu0 0
      %938 = vmatprep.subr.bf16.mxu0 0
      %939 = vmatpush1.bf16.msra.mxu0 0
      %940 = vmatprep.subr.bf16.mxu0 0
      %941 = vmatpush1.bf16.msra.mxu0 0
      %942 = vmatprep.subr.bf16.mxu0 0
      %943 = vmatpush1.bf16.msra.mxu0 0
      %944 = vmatprep.subr.bf16.mxu0 0
      %945 = vmatpush1.bf16.msra.mxu0 0
      %946 = vmatprep.mubr.bf16.mxu0 0
      %947 = vmatmul.mubr.bf16.gmra.mrb[0].mxu0 %v909
      %v948 = vpop.f32.mrb[0].mxu0
      %v949 = vadd.f32 0.0, %v948
      %v950 = vpop.f32.mrb[0].mxu0
      %v951 = vpop.f32.mrb[0].mxu0
      %v952 = vpop.f32.mrb[0].mxu0
      %953 = vdwg.mxu0
      %v954 = vadd.f32 %v904, %v949
      %955 = vst.msk [vmem:[#allocation3] sm:$0xff] %vm381, %v954
      %v956 = vld [vmem:[#allocation2] sm:$0xff]
      %v957 = vpack.c.bf16 %v956, %v956
      %959 = vrot.lane.b32.xlu0 %v957, 104
      %v960 = vpop.permute.xlu0 %959
      %961 = vrot.lane.b32.xlu0 %v957, 72
      %v962 = vpop.permute.xlu0 %961
      %v964 = vsel %vm467, %v960, 0
      %v967 = vsel %vm467, %v962, 0
      %969 = vmatprep.subr.bf16.mxu0 0
      %970 = vmatpush1.bf16.xpose.msra.mxu0 %v967
      %971 = vmatprep.subr.bf16.mxu0 0
      %972 = vmatpush1.bf16.xpose.msra.mxu0 0
      %973 = vmatprep.subr.bf16.mxu0 0
      %974 = vmatpush1.bf16.xpose.msra.mxu0 0
      %975 = vmatprep.subr.bf16.mxu0 0
      %976 = vmatpush1.bf16.xpose.msra.mxu0 0
      %977 = vmatprep.subr.bf16.mxu0 0
      %978 = vmatpush1.bf16.xpose.msra.mxu0 0
      %979 = vmatprep.subr.bf16.mxu0 0
      %980 = vmatpush1.bf16.xpose.msra.mxu0 0
      %981 = vmatprep.subr.bf16.mxu0 0
      %982 = vmatpush1.bf16.xpose.msra.mxu0 0
      %983 = vmatprep.subr.bf16.mxu0 0
      %984 = vmatpush1.bf16.xpose.msra.mxu0 0
      %985 = vmatprep.subr.bf16.mxu0 0
      %986 = vmatpush1.bf16.xpose.msra.mxu0 0
      %987 = vmatprep.subr.bf16.mxu0 0
      %988 = vmatpush1.bf16.xpose.msra.mxu0 0
      %989 = vmatprep.subr.bf16.mxu0 0
      %990 = vmatpush1.bf16.xpose.msra.mxu0 0
      %991 = vmatprep.subr.bf16.mxu0 0
      %992 = vmatpush1.bf16.xpose.msra.mxu0 0
      %993 = vmatprep.subr.bf16.mxu0 0
      %994 = vmatpush1.bf16.xpose.msra.mxu0 0
      %995 = vmatprep.subr.bf16.mxu0 0
      %996 = vmatpush1.bf16.xpose.msra.mxu0 0
      %997 = vmatprep.subr.bf16.mxu0 0
      %998 = vmatpush1.bf16.xpose.msra.mxu0 0
      %999 = vmatprep.subr.bf16.mxu0 0
      %1000 = vmatpush1.bf16.xpose.msra.mxu0 0
      %1001 = vmatprep.mubr.bf16.mxu0 0
      %1002 = vmatmul.mubr.bf16.gmra.mrb[0].mxu0 %v964
      %v1003 = vpop.f32.mrb[0].mxu0
      %v1004 = vadd.f32 %v451, %v1003
      %v1005 = vpop.f32.mrb[0].mxu0
      %v1006 = vpop.f32.mrb[0].mxu0
      %v1007 = vpop.f32.mrb[0].mxu0
      %1008 = vdwg.mxu0
      %v1009 = vsel %vm467, %v1004, -inf
      %1010 = vmax.xlane.f32.xlu0 %v1009
      %v1011 = vpop.xlane.xlu0 %1010
      %v1012 = vsub.f32 %v1004, %v1011
      %v1013 = vmul.f32 %v1012, 1.442695
      %v1014 = vpow.pop %v1013
      %v1015 = vsel %vm467, %v1014, 0.0
      %1016 = vadd.xlane.f32.xlu0 %v1015
      %v1017 = vpop.xlane.xlu0 %1016
      %v1018 = vpack.c.bf16 %v1014, %v1014
      %1019 = vrot.lane.b32.xlu0 %v957, 40
      %v1020 = vpop.permute.xlu0 %1019
      %v1022 = vsel %vm467, %v1018, 0
      %v1025 = vsel %vm529, %v1020, 0
      %1027 = vmatprep.subr.bf16.mxu0 0
      %1028 = vmatpush1.bf16.msra.mxu0 %v1025
      %1029 = vmatprep.subr.bf16.mxu0 0
      %1030 = vmatpush1.bf16.msra.mxu0 0
      %1031 = vmatprep.subr.bf16.mxu0 0
      %1032 = vmatpush1.bf16.msra.mxu0 0
      %1033 = vmatprep.subr.bf16.mxu0 0
      %1034 = vmatpush1.bf16.msra.mxu0 0
      %1035 = vmatprep.subr.bf16.mxu0 0
      %1036 = vmatpush1.bf16.msra.mxu0 0
      %1037 = vmatprep.subr.bf16.mxu0 0
      %1038 = vmatpush1.bf16.msra.mxu0 0
      %1039 = vmatprep.subr.bf16.mxu0 0
      %1040 = vmatpush1.bf16.msra.mxu0 0
      %1041 = vmatprep.subr.bf16.mxu0 0
      %1042 = vmatpush1.bf16.msra.mxu0 0
      %1043 = vmatprep.subr.bf16.mxu0 0
      %1044 = vmatpush1.bf16.msra.mxu0 0
      %1045 = vmatprep.subr.bf16.mxu0 0
      %1046 = vmatpush1.bf16.msra.mxu0 0
      %1047 = vmatprep.subr.bf16.mxu0 0
      %1048 = vmatpush1.bf16.msra.mxu0 0
      %1049 = vmatprep.subr.bf16.mxu0 0
      %1050 = vmatpush1.bf16.msra.mxu0 0
      %1051 = vmatprep.subr.bf16.mxu0 0
      %1052 = vmatpush1.bf16.msra.mxu0 0
      %1053 = vmatprep.subr.bf16.mxu0 0
      %1054 = vmatpush1.bf16.msra.mxu0 0
      %1055 = vmatprep.subr.bf16.mxu0 0
      %1056 = vmatpush1.bf16.msra.mxu0 0
      %1057 = vmatprep.subr.bf16.mxu0 0
      %1058 = vmatpush1.bf16.msra.mxu0 0
      %1059 = vmatprep.mubr.bf16.mxu0 0
      %1060 = vmatmul.mubr.bf16.gmra.mrb[0].mxu0 %v1022
      %v1061 = vpop.f32.mrb[0].mxu0
      %v1062 = vadd.f32 0.0, %v1061
      %v1063 = vpop.f32.mrb[0].mxu0
      %v1064 = vpop.f32.mrb[0].mxu0
      %v1065 = vpop.f32.mrb[0].mxu0
      %1066 = vdwg.mxu0
      %v1067 = vrcp.pop %v1017
      %v1068 = vmul.f32 %v1062, %v1067
      %v1069 = vld [vmem:[#allocation3] sm:$0xff]
      %v1070 = vpack.c.bf16 %v1068, %v1068
      %s1071 = scalar_lea.vmem %s5, 12
      %v1072 = vld [vmem:[%s1071] sm:$0xf]
      %v1074 = vsel %vm467, %v1070, 0
      %v1077 = vsel %vm529, %v1072, 0
      %1079 = vmatprep.subr.bf16.mxu0 0
      %1080 = vmatpush1.bf16.msra.mxu0 %v1077
      %1081 = vmatprep.subr.bf16.mxu0 0
      %1082 = vmatpush1.bf16.msra.mxu0 0
      %1083 = vmatprep.subr.bf16.mxu0 0
      %1084 = vmatpush1.bf16.msra.mxu0 0
      %1085 = vmatprep.subr.bf16.mxu0 0
      %1086 = vmatpush1.bf16.msra.mxu0 0
      %1087 = vmatprep.subr.bf16.mxu0 0
      %1088 = vmatpush1.bf16.msra.mxu0 0
      %1089 = vmatprep.subr.bf16.mxu0 0
      %1090 = vmatpush1.bf16.msra.mxu0 0
      %1091 = vmatprep.subr.bf16.mxu0 0
      %1092 = vmatpush1.bf16.msra.mxu0 0
      %1093 = vmatprep.subr.bf16.mxu0 0
      %1094 = vmatpush1.bf16.msra.mxu0 0
      %1095 = vmatprep.subr.bf16.mxu0 0
      %1096 = vmatpush1.bf16.msra.mxu0 0
      %1097 = vmatprep.subr.bf16.mxu0 0
      %1098 = vmatpush1.bf16.msra.mxu0 0
      %1099 = vmatprep.subr.bf16.mxu0 0
      %1100 = vmatpush1.bf16.msra.mxu0 0
      %1101 = vmatprep.subr.bf16.mxu0 0
      %1102 = vmatpush1.bf16.msra.mxu0 0
      %1103 = vmatprep.subr.bf16.mxu0 0
      %1104 = vmatpush1.bf16.msra.mxu0 0
      %1105 = vmatprep.subr.bf16.mxu0 0
      %1106 = vmatpush1.bf16.msra.mxu0 0
      %1107 = vmatprep.subr.bf16.mxu0 0
      %1108 = vmatpush1.bf16.msra.mxu0 0
      %1109 = vmatprep.subr.bf16.mxu0 0
      %1110 = vmatpush1.bf16.msra.mxu0 0
      %1111 = vmatprep.mubr.bf16.mxu0 0
      %1112 = vmatmul.mubr.bf16.gmra.mrb[0].mxu0 %v1074
      %v1113 = vpop.f32.mrb[0].mxu0
      %v1114 = vadd.f32 0.0, %v1113
      %v1115 = vpop.f32.mrb[0].mxu0
      %v1116 = vpop.f32.mrb[0].mxu0
      %v1117 = vpop.f32.mrb[0].mxu0
      %1118 = vdwg.mxu0
      %v1119 = vadd.f32 %v1069, %v1114
      %1120 = vst.msk [vmem:[#allocation3] sm:$0xff] %vm381, %v1119
      %v1121 = vld [vmem:[#allocation3] sm:$0xff]
      %v1122 = vld [vmem:[%s7] sm:$0x1]
      %v1123 = vld [vmem:[%s8] sm:$0x1]
      %v1124 = vsel %vm381, %v1121, 0.0
      %1125 = vadd.xlane.f32.xlu0 %v1124
      %v1126 = vpop.xlane.xlu0 %1125
      %v1127 = vrcp.pop 32.0
      %v1128 = vmul.f32 %v1126, %v1127
      %v1129 = vsub.f32 %v1121, %v1128
      %v1130 = vmul.f32 %v1129, %v1129
      %v1131 = vsel %vm381, %v1130, 0.0
      %1132 = vadd.xlane.f32.xlu0 %v1131
      %v1133 = vpop.xlane.xlu0 %1132
      %v1134 = vmul.f32 %v1133, %v1127
      %v1135 = vadd.f32 %v1134, 1e-05
      %v1136 = vrsqrt.pop %v1135
      %v1137 = vmul.f32 %v1129, %v1136
      %v1139 = vlaneseq
      %v1140 = vshrl.u32 %v1139, 7
      %v1141 = vsub.s32 0, %v1140
      %v1142 = vrot.slane %v1122, %v1141
      %v1144 = vmul.f32 %v1137, %v1142
      %v1146 = vlaneseq
      %v1147 = vshrl.u32 %v1146, 7
      %v1148 = vsub.s32 0, %v1147
      %v1149 = vrot.slane %v1123, %v1148
      %v1151 = vadd.f32 %v1144, %v1149
      %v1152 = vpack.c.bf16 %v1151, %v1151
      %vm1153 = vcmask 257024
      %1154 = vst.msk [vmem:[%s355] sm:$0xf] %vm1153, %v1152
      %p1155 = scmp.lt.s32.totalorder %s20, 1
      %s1156 = scalar_select %p1155, %s20, 1
      %s1157 = smul.addr %s1156, 4
      %s1158 = scalar_lea.vmem %s9, %s1157
      // Predicated region
      $region57: #{bert_unilm_forward.5} parent=55 // pred_check
        %p1159 = pneg %p242
      $region58: #{bert_unilm_forward.5} parent=55 // pred_check_branch
        %1161 = sbr.rel (%p1159) target = $region60
      $region59: #{bert_unilm_forward.5} parent=55 // pred_region
        _
      $region60: #{bert_unilm_forward.5} parent=55 // pred_fallthru
        _
    $region56: #{bert_unilm_forward.5} parent=5 // pred_fallthru
      _
    %p1162 = scmp.le.s32.totalorder 2, %s15
    // Predicated region
    $region61: #{bert_unilm_forward.5} parent=5 // pred_check
      %p1163 = pneg %p1162
    $region62: #{bert_unilm_forward.5} parent=5 // pred_check_branch
      %1165 = sbr.rel (%p1163) target = $region64
    $region63: #{bert_unilm_forward.5} parent=5 // pred_region
      %s1166 = ssub.s32 %s15, 2
      // Predicated region
      $region65: #{bert_unilm_forward.5} parent=63 // pred_check
        %p1167 = pneg %p248
      $region66: #{bert_unilm_forward.5} parent=63 // pred_check_branch
        %1169 = sbr.rel (%p1167) target = $region68
      $region67: #{bert_unilm_forward.5} parent=63 // pred_region
        %p1170 = scmp.lt.s32.totalorder %s21, 1
        %s1171 = scalar_select %p1170, %s21, 1
        %s1172 = smul.addr %s1171, 4
        %s1173 = scalar_lea.vmem %s9, %s1172
      $region68: #{bert_unilm_forward.5} parent=63 // pred_fallthru
        _
    $region64: #{bert_unilm_forward.5} parent=5 // pred_fallthru
      _
  $region6: #{bert_unilm_forward.5} parent=0 // loop_footer
    %s19 = sadd.s32 1, %s15
  $region7: #{bert_unilm_forward.5} parent=0 // loop_footer_branch
    %14 = sbr.rel target = $region3
  $region8: #{bert_unilm_forward.5} parent=0 // loop_exit
    _

</llo_original>
